<compile_context>
chip_gen: v5e
topology: v5e:2x2
jax: 0.10.0
libtpu: 0.0.40
codegen_flags: <defaults>
</compile_context>

<pallas_src>
import jax
import jax.numpy as jnp
from jax.experimental import pallas as pl
from jax.experimental.pallas import tpu as pltpu

_TB = 8   # batch tile (sublanes per block)
_TT = 8   # time steps per grid chunk (multiple of 8 -> clean in-kernel reshape)


def _round_up(n, m):
    return ((n + m - 1) // m) * m


def lstm_chunk_kernel(nsteps_ref, len_ref, x_ref, wih_ref, whh_ref, b_ref,
                      wl_ref, bl_ref, out_ref, h_ref, c_ref):
    """One (batch-block, time-chunk) grid step.

    nsteps_ref: (1,)          int32 SMEM (scalar prefetch) -- max(lengths)
    len_ref   : (tB, 1)       int32 -- per-row sequence lengths
    x_ref     : (tB, tT, Dp)  bf16  -- batch-major input chunk
    wih_ref   : (Dp, Gp)      bf16  -- fused input->gate weights (i,f,g,o)
    whh_ref   : (H,  Gp)      bf16  -- fused hidden->gate weights
    b_ref     : (1,  Gp)      f32   -- b_ih + b_hh
    wl_ref    : (H,  Op)      bf16  -- final linear weight (transposed)
    bl_ref    : (1,  Op)      f32
    out_ref   : (tB, Op)      f32
    h_ref/c_ref: (tB, H)      f32 scratch -- carried state across time chunks
    """
    tB, tT, Dp = x_ref.shape
    Gp = whh_ref.shape[1]
    H = h_ref.shape[1]
    j = pl.program_id(1)
    t0 = j * tT

    @pl.when(j == 0)
    def _init():
        h_ref[...] = jnp.zeros_like(h_ref)
        c_ref[...] = jnp.zeros_like(c_ref)

    # Skip all compute for chunks entirely past max(lengths).
    @pl.when(t0 < nsteps_ref[0])
    def _compute():
        # 1. Chunk input projection: ONE lane-dense MXU matmul (bf16 in,
        #    f32 accumulate), bias folded in so the serial loop is add-free.
        xb = x_ref[...].reshape(tB * tT, Dp)                       # bf16
        proj = (jnp.dot(xb, wih_ref[...],
                        preferred_element_type=jnp.float32) + b_ref[...])
        xp = proj.reshape(tB, tT, Gp)  # small; lives in vregs across the loop
        # TODO(synk): for much larger (tB, tT) stage xp in a VMEM scratch.

        # 2. Hoist loop invariants (JAX does not CSE broadcasts per-iter).
        whh = whh_ref[...]                                          # (H, Gp) bf16
        lens = jnp.broadcast_to(len_ref[...], (tB, H))              # (tB, H) int32
        h = h_ref[...]
        c = c_ref[...]

        # 3. Serial recurrence over the chunk (static unroll). Critical path
        #    per step: one (tB,H)@(H,Gp) matmul + 3 EUP pushes.
        for u in range(tT):
            t = t0 + u
            gates = (jnp.dot(h.astype(whh.dtype), whh,
                             preferred_element_type=jnp.float32)
                     + xp[:, u, :])                                 # (tB, Gp) f32
            sig = jax.nn.sigmoid(gates)          # one full-width EUP push
            i_g = sig[:, 0 * H:1 * H]
            f_g = sig[:, 1 * H:2 * H]
            o_g = sig[:, 3 * H:4 * H]
            g_g = jnp.tanh(gates[:, 2 * H:3 * H])
            c_new = f_g * c + i_g * g_g
            h_new = o_g * jnp.tanh(c_new)
            # pack_padded_sequence: freeze state once t >= length so the carry
            # holds each row's last valid hidden state.
            valid = t < lens
            h = jnp.where(valid, h_new, h)
            c = jnp.where(valid, c_new, c)

        h_ref[...] = h
        c_ref[...] = c

    # 4. Final Linear on the last valid hidden state, once per batch block.
    @pl.when(j == pl.num_programs(1) - 1)
    def _finalize():
        out_ref[...] = (jnp.dot(h_ref[...].astype(wl_ref.dtype), wl_ref[...],
                                preferred_element_type=jnp.float32)
                        + bl_ref[...])


def init_params(key, in_size, hidden_size, out_size):
    """Deterministic PyTorch-style init (U(-1/sqrt(H), 1/sqrt(H)))."""
    ks = jax.random.split(key, 6)
    s = 1.0 / float(hidden_size) ** 0.5
    W_ih = jax.random.uniform(ks[0], (4 * hidden_size, in_size), jnp.float32, -s, s)
    W_hh = jax.random.uniform(ks[1], (4 * hidden_size, hidden_size), jnp.float32, -s, s)
    b_ih = jax.random.uniform(ks[2], (4 * hidden_size,), jnp.float32, -s, s)
    b_hh = jax.random.uniform(ks[3], (4 * hidden_size,), jnp.float32, -s, s)
    W_l = jax.random.uniform(ks[4], (out_size, hidden_size), jnp.float32, -s, s)
    b_l = jax.random.uniform(ks[5], (out_size,), jnp.float32, -s, s)
    return dict(W_ih=W_ih, W_hh=W_hh, b_ih=b_ih, b_hh=b_hh, W_l=W_l, b_l=b_l)


@jax.jit
def auvi_subnet_forward(x, lengths, W_ih, W_hh, b_ih, b_hh, W_l, b_l):
    """x: (B, T, D) float32, lengths: (B,) int32 -> (B, out_size) float32."""
    B, T, D = x.shape
    H = W_hh.shape[1]
    O = W_l.shape[0]
    G = 4 * H

    # Lane/sublane-dense padding (no-ops at aligned production shapes).
    Bp = _round_up(B, _TB)
    Tp = _round_up(T, _TT)
    Dp = _round_up(D, 128)
    Gp = _round_up(G, 128)
    Op = _round_up(O, 128)

    # bf16 matmul operands (f32 accumulation in kernel); biases/state stay f32.
    # x stays batch-major -- the T-grid BlockSpec does the time slicing.
    x_p = jnp.zeros((Bp, Tp, Dp), jnp.bfloat16).at[:B, :T, :D].set(
        x.astype(jnp.bfloat16))
    wih = jnp.zeros((Dp, Gp), jnp.bfloat16).at[:D, :G].set(
        W_ih.T.astype(jnp.bfloat16))
    whh = jnp.zeros((H, Gp), jnp.bfloat16).at[:, :G].set(
        W_hh.T.astype(jnp.bfloat16))
    b = jnp.zeros((1, Gp), jnp.float32).at[:, :G].set(
        (b_ih + b_hh).reshape(1, G).astype(jnp.float32))
    wl = jnp.zeros((H, Op), jnp.bfloat16).at[:, :O].set(
        W_l.T.astype(jnp.bfloat16))
    bl = jnp.zeros((1, Op), jnp.float32).at[:, :O].set(
        b_l.reshape(1, O).astype(jnp.float32))

    len_p = jnp.zeros((Bp, 1), jnp.int32).at[:B, 0].set(lengths.astype(jnp.int32))
    nsteps = jnp.minimum(jnp.max(len_p), T).astype(jnp.int32).reshape(1)

    n_b = Bp // _TB
    n_t = Tp // _TT

    grid_spec = pltpu.PrefetchScalarGridSpec(
        num_scalar_prefetch=1,
        grid=(n_b, n_t),
        in_specs=[
            pl.BlockSpec((_TB, 1), lambda i, j, ns: (i, 0)),            # lengths
            pl.BlockSpec((_TB, _TT, Dp), lambda i, j, ns: (i, j, 0)),   # x chunk
            pl.BlockSpec((Dp, Gp), lambda i, j, ns: (0, 0)),            # W_ih
            pl.BlockSpec((H, Gp), lambda i, j, ns: (0, 0)),             # W_hh
            pl.BlockSpec((1, Gp), lambda i, j, ns: (0, 0)),             # bias
            pl.BlockSpec((H, Op), lambda i, j, ns: (0, 0)),             # W_l
            pl.BlockSpec((1, Op), lambda i, j, ns: (0, 0)),             # b_l
        ],
        out_specs=pl.BlockSpec((_TB, Op), lambda i, j, ns: (i, 0)),
        scratch_shapes=[
            pltpu.VMEM((_TB, H), jnp.float32),   # h carry
            pltpu.VMEM((_TB, H), jnp.float32),   # c carry
        ],
    )

    out_p = pl.pallas_call(
        lstm_chunk_kernel,
        out_shape=jax.ShapeDtypeStruct((Bp, Op), jnp.float32),
        grid_spec=grid_spec,
        compiler_params=pltpu.CompilerParams(
            dimension_semantics=("parallel", "arbitrary"),
            vmem_limit_bytes=32 * 1024 * 1024),
    )(nsteps, len_p, x_p, wih, whh, b, wl, bl)

    return out_p[:B, :O]


def auvi_subnet_reference(x, lengths, W_ih, W_hh, b_ih, b_hh, W_l, b_l):
    """Pure-JAX f32 reference with identical semantics (correctness check)."""
    B, T, D = x.shape
    H = W_hh.shape[1]
    h = jnp.zeros((B, H), jnp.float32)
    c = jnp.zeros((B, H), jnp.float32)
    for t in range(T):
        gates = x[:, t, :] @ W_ih.T + h @ W_hh.T + b_ih + b_hh   # (B, 4H)
        i_g = jax.nn.sigmoid(gates[:, 0 * H:1 * H])
        f_g = jax.nn.sigmoid(gates[:, 1 * H:2 * H])
        g_g = jnp.tanh(gates[:, 2 * H:3 * H])
        o_g = jax.nn.sigmoid(gates[:, 3 * H:4 * H])
        c_new = f_g * c + i_g * g_g
        h_new = o_g * jnp.tanh(c_new)
        valid = (t < lengths).reshape(B, 1)
        h = jnp.where(valid, h_new, h)
        c = jnp.where(valid, c_new, c)
    return h @ W_l.T + b_l


if __name__ == "__main__":
    B, T, D, H, O = 10, 24, 16, 32, 16

    key = jax.random.PRNGKey(0)
    k_x, k_p = jax.random.split(key)
    x = jax.random.normal(k_x, (B, T, D), dtype=jnp.float32)
    p = init_params(k_p, D, H, O)

    def run_and_check(lengths):
        y = auvi_subnet_forward(x, lengths, p["W_ih"], p["W_hh"], p["b_ih"],
                                p["b_hh"], p["W_l"], p["b_l"])
        y = jax.block_until_ready(y)
        y_ref = auvi_subnet_reference(x, lengths, p["W_ih"], p["W_hh"],
                                      p["b_ih"], p["b_hh"], p["W_l"], p["b_l"])
        assert y.shape == (B, O)
        # bf16 matmul operands (f32 accumulate) -> small drift vs f32 reference.
        assert jnp.allclose(y, y_ref, atol=5e-2, rtol=5e-2), "mismatch vs reference"

    # Case 1: includes full-length rows (all time chunks active).
    run_and_check(jnp.array([24, 5, 14, 7, 24, 1, 16, 3, 20, 12], dtype=jnp.int32))
    # Case 2: all short sequences -> last time chunk is skipped via pl.when.
    run_and_check(jnp.array([12, 5, 9, 7, 3, 1, 11, 2, 10, 6], dtype=jnp.int32))

    print("KERNEL_OK")
</pallas_src>

<mosaic_0001>
module attributes {stable_mosaic.version = 11 : i64} {
  func.func @lstm_chunk_kernel(%arg0: i32, %arg1: i32, %arg2: memref<1xi32, #tpu.memory_space<smem>>, %arg3: memref<8x1xi32, #tpu.memory_space<vmem>>, %arg4: memref<8x8x128xbf16, #tpu.memory_space<vmem>>, %arg5: memref<128x128xbf16, #tpu.memory_space<vmem>>, %arg6: memref<32x128xbf16, #tpu.memory_space<vmem>>, %arg7: memref<1x128xf32, #tpu.memory_space<vmem>>, %arg8: memref<32x128xbf16, #tpu.memory_space<vmem>>, %arg9: memref<1x128xf32, #tpu.memory_space<vmem>>, %arg10: memref<8x128xf32, #tpu.memory_space<vmem>>, %arg11: memref<8x32xf32, #tpu.memory_space<vmem>>, %arg12: memref<8x32xf32, #tpu.memory_space<vmem>>) attributes {dimension_semantics = [#tpu.dimension_semantics<parallel>, #tpu.dimension_semantics<arbitrary>], iteration_bounds = array<i64: 2, 3>, scalar_prefetch = 1 : i64, scratch_operands = 2 : i64, tpu.core_type = #tpu.core_type<tc>, window_params = [{transform_indices = @transform_0, window_bounds = array<i64: 8, 1>}, {transform_indices = @transform_1, window_bounds = array<i64: 8, 8, 128>}, {pipeline_mode = #tpu.pipeline_mode<synchronous>, transform_indices = @transform_2, window_bounds = array<i64: 128, 128>}, {pipeline_mode = #tpu.pipeline_mode<synchronous>, transform_indices = @transform_3, window_bounds = array<i64: 32, 128>}, {pipeline_mode = #tpu.pipeline_mode<synchronous>, transform_indices = @transform_4, window_bounds = array<i64: 1, 128>}, {pipeline_mode = #tpu.pipeline_mode<synchronous>, transform_indices = @transform_5, window_bounds = array<i64: 32, 128>}, {pipeline_mode = #tpu.pipeline_mode<synchronous>, transform_indices = @transform_6, window_bounds = array<i64: 1, 128>}, {transform_indices = @transform_7, window_bounds = array<i64: 8, 128>}]} {
    %c8_i32 = arith.constant 8 : i32
    %0 = arith.muli %arg1, %c8_i32 : i32
    %c0_i32 = arith.constant 0 : i32
    %1 = arith.cmpi eq, %arg1, %c0_i32 : i32
    %2 = arith.extui %1 : i1 to i32
    %c0_i32_0 = arith.constant 0 : i32
    %3 = arith.cmpi ne, %2, %c0_i32_0 : i32
    scf.if %3 {
      %cst = arith.constant 0.000000e+00 : f32
      %11 = vector.broadcast %cst : f32 to vector<8x32xf32>
      %c0_3 = arith.constant 0 : index
      %c0_4 = arith.constant 0 : index
      %12 = vector.load %arg11[%c0_3, %c0_4] : memref<8x32xf32, #tpu.memory_space<vmem>>, vector<8x32xf32>
      tpu.vector_store %arg11[%c0_3, %c0_4], %11 {strides = array<i32>} : memref<8x32xf32, #tpu.memory_space<vmem>>, vector<8x32xf32>,
      %cst_5 = arith.constant 0.000000e+00 : f32
      %13 = vector.broadcast %cst_5 : f32 to vector<8x32xf32>
      %c0_6 = arith.constant 0 : index
      %c0_7 = arith.constant 0 : index
      %14 = vector.load %arg12[%c0_6, %c0_7] : memref<8x32xf32, #tpu.memory_space<vmem>>, vector<8x32xf32>
      tpu.vector_store %arg12[%c0_6, %c0_7], %13 {strides = array<i32>} : memref<8x32xf32, #tpu.memory_space<vmem>>, vector<8x32xf32>,
    } else {
    }
    %c0 = arith.constant 0 : index
    %4 = memref.load %arg2[%c0] : memref<1xi32, #tpu.memory_space<smem>>
    %5 = arith.cmpi slt, %0, %4 : i32
    %6 = arith.extui %5 : i1 to i32
    %c0_i32_1 = arith.constant 0 : i32
    %7 = arith.cmpi ne, %6, %c0_i32_1 : i32
    scf.if %7 {
      %c0_3 = arith.constant 0 : index
      %c0_4 = arith.constant 0 : index
      %c0_5 = arith.constant 0 : index
      %11 = vector.load %arg4[%c0_3, %c0_4, %c0_5] : memref<8x8x128xbf16, #tpu.memory_space<vmem>>, vector<8x8x128xbf16>
      %12 = vector.shape_cast %11 : vector<8x8x128xbf16> to vector<64x128xbf16>
      %c0_6 = arith.constant 0 : index
      %c0_7 = arith.constant 0 : index
      %13 = vector.load %arg5[%c0_6, %c0_7] : memref<128x128xbf16, #tpu.memory_space<vmem>>, vector<128x128xbf16>
      %cst = arith.constant dense<0.000000e+00> : vector<64x128xf32>
      %14 = tpu.matmul %12, %13, %cst {dimension_numbers = #tpu.dot_dimension_numbers<[1], [0], [0], [1], [0, 0, 1, 1], [], []>} : vector<64x128xbf16>, vector<128x128xbf16>, vector<64x128xf32> -> vector<64x128xf32>
      %c0_8 = arith.constant 0 : index
      %c0_9 = arith.constant 0 : index
      %15 = vector.load %arg7[%c0_8, %c0_9] : memref<1x128xf32, #tpu.memory_space<vmem>>, vector<1x128xf32>
      %16 = vector.broadcast %15 : vector<1x128xf32> to vector<64x128xf32>
      %17 = arith.addf %14, %16 : vector<64x128xf32>
      %18 = vector.shape_cast %17 : vector<64x128xf32> to vector<8x8x128xf32>
      %c0_10 = arith.constant 0 : index
      %c0_11 = arith.constant 0 : index
      %19 = vector.load %arg6[%c0_10, %c0_11] : memref<32x128xbf16, #tpu.memory_space<vmem>>, vector<32x128xbf16>
      %c0_12 = arith.constant 0 : index
      %c0_13 = arith.constant 0 : index
      %20 = vector.load %arg3[%c0_12, %c0_13] : memref<8x1xi32, #tpu.memory_space<vmem>>, vector<8x1xi32>
      %21 = vector.shape_cast %20 : vector<8x1xi32> to vector<8x1xi32>
      %22 = vector.broadcast %21 : vector<8x1xi32> to vector<8x32xi32>
      %c0_14 = arith.constant 0 : index
      %c0_15 = arith.constant 0 : index
      %23 = vector.load %arg11[%c0_14, %c0_15] : memref<8x32xf32, #tpu.memory_space<vmem>>, vector<8x32xf32>
      %c0_16 = arith.constant 0 : index
      %c0_17 = arith.constant 0 : index
      %24 = vector.load %arg12[%c0_16, %c0_17] : memref<8x32xf32, #tpu.memory_space<vmem>>, vector<8x32xf32>
      %c0_i32_18 = arith.constant 0 : i32
      %25 = arith.addi %0, %c0_i32_18 : i32
      %26 = arith.truncf %23 : vector<8x32xf32> to vector<8x32xbf16>
      %cst_19 = arith.constant dense<0.000000e+00> : vector<8x128xf32>
      %27 = tpu.matmul %26, %19, %cst_19 {dimension_numbers = #tpu.dot_dimension_numbers<[1], [0], [0], [1], [0, 0, 1, 1], [], []>} : vector<8x32xbf16>, vector<32x128xbf16>, vector<8x128xf32> -> vector<8x128xf32>
      %28 = vector.extract_strided_slice %18 {offsets = [0, 0, 0], sizes = [8, 1, 128], strides = [1, 1, 1]} : vector<8x8x128xf32> to vector<8x1x128xf32>
      %29 = vector.shape_cast %28 : vector<8x1x128xf32> to vector<8x128xf32>
      %30 = arith.addf %27, %29 : vector<8x128xf32>
      %31 = arith.negf %30 : vector<8x128xf32>
      %32 = math.exp %31 : vector<8x128xf32>
      %cst_20 = arith.constant 1.000000e+00 : f32
      %33 = vector.broadcast %cst_20 : f32 to vector<8x128xf32>
      %34 = arith.addf %33, %32 : vector<8x128xf32>
      %35 = arith.divf %33, %34 : vector<8x128xf32>
      %36 = vector.extract_strided_slice %35 {offsets = [0, 0], sizes = [8, 32], strides = [1, 1]} : vector<8x128xf32> to vector<8x32xf32>
      %37 = vector.extract_strided_slice %35 {offsets = [0, 32], sizes = [8, 32], strides = [1, 1]} : vector<8x128xf32> to vector<8x32xf32>
      %38 = vector.extract_strided_slice %35 {offsets = [0, 96], sizes = [8, 32], strides = [1, 1]} : vector<8x128xf32> to vector<8x32xf32>
      %39 = vector.extract_strided_slice %30 {offsets = [0, 64], sizes = [8, 32], strides = [1, 1]} : vector<8x128xf32> to vector<8x32xf32>
      %40 = math.tanh %39 : vector<8x32xf32>
      %41 = arith.mulf %37, %24 : vector<8x32xf32>
      %42 = arith.mulf %36, %40 : vector<8x32xf32>
      %43 = arith.addf %41, %42 : vector<8x32xf32>
      %44 = math.tanh %43 : vector<8x32xf32>
      %45 = arith.mulf %38, %44 : vector<8x32xf32>
      %46 = vector.broadcast %25 : i32 to vector<8x32xi32>
      %47 = arith.cmpi slt, %46, %22 : vector<8x32xi32>
      %48 = arith.select %47, %45, %23 : vector<8x32xi1>, vector<8x32xf32>
      %49 = arith.select %47, %43, %24 : vector<8x32xi1>, vector<8x32xf32>
      %c1_i32 = arith.constant 1 : i32
      %50 = arith.addi %0, %c1_i32 : i32
      %51 = arith.truncf %48 : vector<8x32xf32> to vector<8x32xbf16>
      %cst_21 = arith.constant dense<0.000000e+00> : vector<8x128xf32>
      %52 = tpu.matmul %51, %19, %cst_21 {dimension_numbers = #tpu.dot_dimension_numbers<[1], [0], [0], [1], [0, 0, 1, 1], [], []>} : vector<8x32xbf16>, vector<32x128xbf16>, vector<8x128xf32> -> vector<8x128xf32>
      %53 = vector.extract_strided_slice %18 {offsets = [0, 1, 0], sizes = [8, 1, 128], strides = [1, 1, 1]} : vector<8x8x128xf32> to vector<8x1x128xf32>
      %54 = vector.shape_cast %53 : vector<8x1x128xf32> to vector<8x128xf32>
      %55 = arith.addf %52, %54 : vector<8x128xf32>
      %56 = arith.negf %55 : vector<8x128xf32>
      %57 = math.exp %56 : vector<8x128xf32>
      %cst_22 = arith.constant 1.000000e+00 : f32
      %58 = vector.broadcast %cst_22 : f32 to vector<8x128xf32>
      %59 = arith.addf %58, %57 : vector<8x128xf32>
      %60 = arith.divf %58, %59 : vector<8x128xf32>
      %61 = vector.extract_strided_slice %60 {offsets = [0, 0], sizes = [8, 32], strides = [1, 1]} : vector<8x128xf32> to vector<8x32xf32>
      %62 = vector.extract_strided_slice %60 {offsets = [0, 32], sizes = [8, 32], strides = [1, 1]} : vector<8x128xf32> to vector<8x32xf32>
      %63 = vector.extract_strided_slice %60 {offsets = [0, 96], sizes = [8, 32], strides = [1, 1]} : vector<8x128xf32> to vector<8x32xf32>
      %64 = vector.extract_strided_slice %55 {offsets = [0, 64], sizes = [8, 32], strides = [1, 1]} : vector<8x128xf32> to vector<8x32xf32>
      %65 = math.tanh %64 : vector<8x32xf32>
      %66 = arith.mulf %62, %49 : vector<8x32xf32>
      %67 = arith.mulf %61, %65 : vector<8x32xf32>
      %68 = arith.addf %66, %67 : vector<8x32xf32>
      %69 = math.tanh %68 : vector<8x32xf32>
      %70 = arith.mulf %63, %69 : vector<8x32xf32>
      %71 = vector.broadcast %50 : i32 to vector<8x32xi32>
      %72 = arith.cmpi slt, %71, %22 : vector<8x32xi32>
      %73 = arith.select %72, %70, %48 : vector<8x32xi1>, vector<8x32xf32>
      %74 = arith.select %72, %68, %49 : vector<8x32xi1>, vector<8x32xf32>
      %c2_i32_23 = arith.constant 2 : i32
      %75 = arith.addi %0, %c2_i32_23 : i32
      %76 = arith.truncf %73 : vector<8x32xf32> to vector<8x32xbf16>
      %cst_24 = arith.constant dense<0.000000e+00> : vector<8x128xf32>
      %77 = tpu.matmul %76, %19, %cst_24 {dimension_numbers = #tpu.dot_dimension_numbers<[1], [0], [0], [1], [0, 0, 1, 1], [], []>} : vector<8x32xbf16>, vector<32x128xbf16>, vector<8x128xf32> -> vector<8x128xf32>
      %78 = vector.extract_strided_slice %18 {offsets = [0, 2, 0], sizes = [8, 1, 128], strides = [1, 1, 1]} : vector<8x8x128xf32> to vector<8x1x128xf32>
      %79 = vector.shape_cast %78 : vector<8x1x128xf32> to vector<8x128xf32>
      %80 = arith.addf %77, %79 : vector<8x128xf32>
      %81 = arith.negf %80 : vector<8x128xf32>
      %82 = math.exp %81 : vector<8x128xf32>
      %cst_25 = arith.constant 1.000000e+00 : f32
      %83 = vector.broadcast %cst_25 : f32 to vector<8x128xf32>
      %84 = arith.addf %83, %82 : vector<8x128xf32>
      %85 = arith.divf %83, %84 : vector<8x128xf32>
      %86 = vector.extract_strided_slice %85 {offsets = [0, 0], sizes = [8, 32], strides = [1, 1]} : vector<8x128xf32> to vector<8x32xf32>
      %87 = vector.extract_strided_slice %85 {offsets = [0, 32], sizes = [8, 32], strides = [1, 1]} : vector<8x128xf32> to vector<8x32xf32>
      %88 = vector.extract_strided_slice %85 {offsets = [0, 96], sizes = [8, 32], strides = [1, 1]} : vector<8x128xf32> to vector<8x32xf32>
      %89 = vector.extract_strided_slice %80 {offsets = [0, 64], sizes = [8, 32], strides = [1, 1]} : vector<8x128xf32> to vector<8x32xf32>
      %90 = math.tanh %89 : vector<8x32xf32>
      %91 = arith.mulf %87, %74 : vector<8x32xf32>
      %92 = arith.mulf %86, %90 : vector<8x32xf32>
      %93 = arith.addf %91, %92 : vector<8x32xf32>
      %94 = math.tanh %93 : vector<8x32xf32>
      %95 = arith.mulf %88, %94 : vector<8x32xf32>
      %96 = vector.broadcast %75 : i32 to vector<8x32xi32>
      %97 = arith.cmpi slt, %96, %22 : vector<8x32xi32>
      %98 = arith.select %97, %95, %73 : vector<8x32xi1>, vector<8x32xf32>
      %99 = arith.select %97, %93, %74 : vector<8x32xi1>, vector<8x32xf32>
      %c3_i32 = arith.constant 3 : i32
      %100 = arith.addi %0, %c3_i32 : i32
      %101 = arith.truncf %98 : vector<8x32xf32> to vector<8x32xbf16>
      %cst_26 = arith.constant dense<0.000000e+00> : vector<8x128xf32>
      %102 = tpu.matmul %101, %19, %cst_26 {dimension_numbers = #tpu.dot_dimension_numbers<[1], [0], [0], [1], [0, 0, 1, 1], [], []>} : vector<8x32xbf16>, vector<32x128xbf16>, vector<8x128xf32> -> vector<8x128xf32>
      %103 = vector.extract_strided_slice %18 {offsets = [0, 3, 0], sizes = [8, 1, 128], strides = [1, 1, 1]} : vector<8x8x128xf32> to vector<8x1x128xf32>
      %104 = vector.shape_cast %103 : vector<8x1x128xf32> to vector<8x128xf32>
      %105 = arith.addf %102, %104 : vector<8x128xf32>
      %106 = arith.negf %105 : vector<8x128xf32>
      %107 = math.exp %106 : vector<8x128xf32>
      %cst_27 = arith.constant 1.000000e+00 : f32
      %108 = vector.broadcast %cst_27 : f32 to vector<8x128xf32>
      %109 = arith.addf %108, %107 : vector<8x128xf32>
      %110 = arith.divf %108, %109 : vector<8x128xf32>
      %111 = vector.extract_strided_slice %110 {offsets = [0, 0], sizes = [8, 32], strides = [1, 1]} : vector<8x128xf32> to vector<8x32xf32>
      %112 = vector.extract_strided_slice %110 {offsets = [0, 32], sizes = [8, 32], strides = [1, 1]} : vector<8x128xf32> to vector<8x32xf32>
      %113 = vector.extract_strided_slice %110 {offsets = [0, 96], sizes = [8, 32], strides = [1, 1]} : vector<8x128xf32> to vector<8x32xf32>
      %114 = vector.extract_strided_slice %105 {offsets = [0, 64], sizes = [8, 32], strides = [1, 1]} : vector<8x128xf32> to vector<8x32xf32>
      %115 = math.tanh %114 : vector<8x32xf32>
      %116 = arith.mulf %112, %99 : vector<8x32xf32>
      %117 = arith.mulf %111, %115 : vector<8x32xf32>
      %118 = arith.addf %116, %117 : vector<8x32xf32>
      %119 = math.tanh %118 : vector<8x32xf32>
      %120 = arith.mulf %113, %119 : vector<8x32xf32>
      %121 = vector.broadcast %100 : i32 to vector<8x32xi32>
      %122 = arith.cmpi slt, %121, %22 : vector<8x32xi32>
      %123 = arith.select %122, %120, %98 : vector<8x32xi1>, vector<8x32xf32>
      %124 = arith.select %122, %118, %99 : vector<8x32xi1>, vector<8x32xf32>
      %c4_i32 = arith.constant 4 : i32
      %125 = arith.addi %0, %c4_i32 : i32
      %126 = arith.truncf %123 : vector<8x32xf32> to vector<8x32xbf16>
      %cst_28 = arith.constant dense<0.000000e+00> : vector<8x128xf32>
      %127 = tpu.matmul %126, %19, %cst_28 {dimension_numbers = #tpu.dot_dimension_numbers<[1], [0], [0], [1], [0, 0, 1, 1], [], []>} : vector<8x32xbf16>, vector<32x128xbf16>, vector<8x128xf32> -> vector<8x128xf32>
      %128 = vector.extract_strided_slice %18 {offsets = [0, 4, 0], sizes = [8, 1, 128], strides = [1, 1, 1]} : vector<8x8x128xf32> to vector<8x1x128xf32>
      %129 = vector.shape_cast %128 : vector<8x1x128xf32> to vector<8x128xf32>
      %130 = arith.addf %127, %129 : vector<8x128xf32>
      %131 = arith.negf %130 : vector<8x128xf32>
      %132 = math.exp %131 : vector<8x128xf32>
      %cst_29 = arith.constant 1.000000e+00 : f32
      %133 = vector.broadcast %cst_29 : f32 to vector<8x128xf32>
      %134 = arith.addf %133, %132 : vector<8x128xf32>
      %135 = arith.divf %133, %134 : vector<8x128xf32>
      %136 = vector.extract_strided_slice %135 {offsets = [0, 0], sizes = [8, 32], strides = [1, 1]} : vector<8x128xf32> to vector<8x32xf32>
      %137 = vector.extract_strided_slice %135 {offsets = [0, 32], sizes = [8, 32], strides = [1, 1]} : vector<8x128xf32> to vector<8x32xf32>
      %138 = vector.extract_strided_slice %135 {offsets = [0, 96], sizes = [8, 32], strides = [1, 1]} : vector<8x128xf32> to vector<8x32xf32>
      %139 = vector.extract_strided_slice %130 {offsets = [0, 64], sizes = [8, 32], strides = [1, 1]} : vector<8x128xf32> to vector<8x32xf32>
      %140 = math.tanh %139 : vector<8x32xf32>
      %141 = arith.mulf %137, %124 : vector<8x32xf32>
      %142 = arith.mulf %136, %140 : vector<8x32xf32>
      %143 = arith.addf %141, %142 : vector<8x32xf32>
      %144 = math.tanh %143 : vector<8x32xf32>
      %145 = arith.mulf %138, %144 : vector<8x32xf32>
      %146 = vector.broadcast %125 : i32 to vector<8x32xi32>
      %147 = arith.cmpi slt, %146, %22 : vector<8x32xi32>
      %148 = arith.select %147, %145, %123 : vector<8x32xi1>, vector<8x32xf32>
      %149 = arith.select %147, %143, %124 : vector<8x32xi1>, vector<8x32xf32>
      %c5_i32 = arith.constant 5 : i32
      %150 = arith.addi %0, %c5_i32 : i32
      %151 = arith.truncf %148 : vector<8x32xf32> to vector<8x32xbf16>
      %cst_30 = arith.constant dense<0.000000e+00> : vector<8x128xf32>
      %152 = tpu.matmul %151, %19, %cst_30 {dimension_numbers = #tpu.dot_dimension_numbers<[1], [0], [0], [1], [0, 0, 1, 1], [], []>} : vector<8x32xbf16>, vector<32x128xbf16>, vector<8x128xf32> -> vector<8x128xf32>
      %153 = vector.extract_strided_slice %18 {offsets = [0, 5, 0], sizes = [8, 1, 128], strides = [1, 1, 1]} : vector<8x8x128xf32> to vector<8x1x128xf32>
      %154 = vector.shape_cast %153 : vector<8x1x128xf32> to vector<8x128xf32>
      %155 = arith.addf %152, %154 : vector<8x128xf32>
      %156 = arith.negf %155 : vector<8x128xf32>
      %157 = math.exp %156 : vector<8x128xf32>
      %cst_31 = arith.constant 1.000000e+00 : f32
      %158 = vector.broadcast %cst_31 : f32 to vector<8x128xf32>
      %159 = arith.addf %158, %157 : vector<8x128xf32>
      %160 = arith.divf %158, %159 : vector<8x128xf32>
      %161 = vector.extract_strided_slice %160 {offsets = [0, 0], sizes = [8, 32], strides = [1, 1]} : vector<8x128xf32> to vector<8x32xf32>
      %162 = vector.extract_strided_slice %160 {offsets = [0, 32], sizes = [8, 32], strides = [1, 1]} : vector<8x128xf32> to vector<8x32xf32>
      %163 = vector.extract_strided_slice %160 {offsets = [0, 96], sizes = [8, 32], strides = [1, 1]} : vector<8x128xf32> to vector<8x32xf32>
      %164 = vector.extract_strided_slice %155 {offsets = [0, 64], sizes = [8, 32], strides = [1, 1]} : vector<8x128xf32> to vector<8x32xf32>
      %165 = math.tanh %164 : vector<8x32xf32>
      %166 = arith.mulf %162, %149 : vector<8x32xf32>
      %167 = arith.mulf %161, %165 : vector<8x32xf32>
      %168 = arith.addf %166, %167 : vector<8x32xf32>
      %169 = math.tanh %168 : vector<8x32xf32>
      %170 = arith.mulf %163, %169 : vector<8x32xf32>
      %171 = vector.broadcast %150 : i32 to vector<8x32xi32>
      %172 = arith.cmpi slt, %171, %22 : vector<8x32xi32>
      %173 = arith.select %172, %170, %148 : vector<8x32xi1>, vector<8x32xf32>
      %174 = arith.select %172, %168, %149 : vector<8x32xi1>, vector<8x32xf32>
      %c6_i32 = arith.constant 6 : i32
      %175 = arith.addi %0, %c6_i32 : i32
      %176 = arith.truncf %173 : vector<8x32xf32> to vector<8x32xbf16>
      %cst_32 = arith.constant dense<0.000000e+00> : vector<8x128xf32>
      %177 = tpu.matmul %176, %19, %cst_32 {dimension_numbers = #tpu.dot_dimension_numbers<[1], [0], [0], [1], [0, 0, 1, 1], [], []>} : vector<8x32xbf16>, vector<32x128xbf16>, vector<8x128xf32> -> vector<8x128xf32>
      %178 = vector.extract_strided_slice %18 {offsets = [0, 6, 0], sizes = [8, 1, 128], strides = [1, 1, 1]} : vector<8x8x128xf32> to vector<8x1x128xf32>
      %179 = vector.shape_cast %178 : vector<8x1x128xf32> to vector<8x128xf32>
      %180 = arith.addf %177, %179 : vector<8x128xf32>
      %181 = arith.negf %180 : vector<8x128xf32>
      %182 = math.exp %181 : vector<8x128xf32>
      %cst_33 = arith.constant 1.000000e+00 : f32
      %183 = vector.broadcast %cst_33 : f32 to vector<8x128xf32>
      %184 = arith.addf %183, %182 : vector<8x128xf32>
      %185 = arith.divf %183, %184 : vector<8x128xf32>
      %186 = vector.extract_strided_slice %185 {offsets = [0, 0], sizes = [8, 32], strides = [1, 1]} : vector<8x128xf32> to vector<8x32xf32>
      %187 = vector.extract_strided_slice %185 {offsets = [0, 32], sizes = [8, 32], strides = [1, 1]} : vector<8x128xf32> to vector<8x32xf32>
      %188 = vector.extract_strided_slice %185 {offsets = [0, 96], sizes = [8, 32], strides = [1, 1]} : vector<8x128xf32> to vector<8x32xf32>
      %189 = vector.extract_strided_slice %180 {offsets = [0, 64], sizes = [8, 32], strides = [1, 1]} : vector<8x128xf32> to vector<8x32xf32>
      %190 = math.tanh %189 : vector<8x32xf32>
      %191 = arith.mulf %187, %174 : vector<8x32xf32>
      %192 = arith.mulf %186, %190 : vector<8x32xf32>
      %193 = arith.addf %191, %192 : vector<8x32xf32>
      %194 = math.tanh %193 : vector<8x32xf32>
      %195 = arith.mulf %188, %194 : vector<8x32xf32>
      %196 = vector.broadcast %175 : i32 to vector<8x32xi32>
      %197 = arith.cmpi slt, %196, %22 : vector<8x32xi32>
      %198 = arith.select %197, %195, %173 : vector<8x32xi1>, vector<8x32xf32>
      %199 = arith.select %197, %193, %174 : vector<8x32xi1>, vector<8x32xf32>
      %c7_i32 = arith.constant 7 : i32
      %200 = arith.addi %0, %c7_i32 : i32
      %201 = arith.truncf %198 : vector<8x32xf32> to vector<8x32xbf16>
      %cst_34 = arith.constant dense<0.000000e+00> : vector<8x128xf32>
      %202 = tpu.matmul %201, %19, %cst_34 {dimension_numbers = #tpu.dot_dimension_numbers<[1], [0], [0], [1], [0, 0, 1, 1], [], []>} : vector<8x32xbf16>, vector<32x128xbf16>, vector<8x128xf32> -> vector<8x128xf32>
      %203 = vector.extract_strided_slice %18 {offsets = [0, 7, 0], sizes = [8, 1, 128], strides = [1, 1, 1]} : vector<8x8x128xf32> to vector<8x1x128xf32>
      %204 = vector.shape_cast %203 : vector<8x1x128xf32> to vector<8x128xf32>
      %205 = arith.addf %202, %204 : vector<8x128xf32>
      %206 = arith.negf %205 : vector<8x128xf32>
      %207 = math.exp %206 : vector<8x128xf32>
      %cst_35 = arith.constant 1.000000e+00 : f32
      %208 = vector.broadcast %cst_35 : f32 to vector<8x128xf32>
      %209 = arith.addf %208, %207 : vector<8x128xf32>
      %210 = arith.divf %208, %209 : vector<8x128xf32>
      %211 = vector.extract_strided_slice %210 {offsets = [0, 0], sizes = [8, 32], strides = [1, 1]} : vector<8x128xf32> to vector<8x32xf32>
      %212 = vector.extract_strided_slice %210 {offsets = [0, 32], sizes = [8, 32], strides = [1, 1]} : vector<8x128xf32> to vector<8x32xf32>
      %213 = vector.extract_strided_slice %210 {offsets = [0, 96], sizes = [8, 32], strides = [1, 1]} : vector<8x128xf32> to vector<8x32xf32>
      %214 = vector.extract_strided_slice %205 {offsets = [0, 64], sizes = [8, 32], strides = [1, 1]} : vector<8x128xf32> to vector<8x32xf32>
      %215 = math.tanh %214 : vector<8x32xf32>
      %216 = arith.mulf %212, %199 : vector<8x32xf32>
      %217 = arith.mulf %211, %215 : vector<8x32xf32>
      %218 = arith.addf %216, %217 : vector<8x32xf32>
      %219 = math.tanh %218 : vector<8x32xf32>
      %220 = arith.mulf %213, %219 : vector<8x32xf32>
      %221 = vector.broadcast %200 : i32 to vector<8x32xi32>
      %222 = arith.cmpi slt, %221, %22 : vector<8x32xi32>
      %223 = arith.select %222, %220, %198 : vector<8x32xi1>, vector<8x32xf32>
      %224 = arith.select %222, %218, %199 : vector<8x32xi1>, vector<8x32xf32>
      %c0_36 = arith.constant 0 : index
      %c0_37 = arith.constant 0 : index
      %225 = vector.load %arg11[%c0_36, %c0_37] : memref<8x32xf32, #tpu.memory_space<vmem>>, vector<8x32xf32>
      tpu.vector_store %arg11[%c0_36, %c0_37], %223 {strides = array<i32>} : memref<8x32xf32, #tpu.memory_space<vmem>>, vector<8x32xf32>,
      %c0_38 = arith.constant 0 : index
      %c0_39 = arith.constant 0 : index
      %226 = vector.load %arg12[%c0_38, %c0_39] : memref<8x32xf32, #tpu.memory_space<vmem>>, vector<8x32xf32>
      tpu.vector_store %arg12[%c0_38, %c0_39], %224 {strides = array<i32>} : memref<8x32xf32, #tpu.memory_space<vmem>>, vector<8x32xf32>,
    } else {
    }
    %c2_i32 = arith.constant 2 : i32
    %8 = arith.cmpi eq, %arg1, %c2_i32 : i32
    %9 = arith.extui %8 : i1 to i32
    %c0_i32_2 = arith.constant 0 : i32
    %10 = arith.cmpi ne, %9, %c0_i32_2 : i32
    scf.if %10 {
      %c0_3 = arith.constant 0 : index
      %c0_4 = arith.constant 0 : index
      %11 = vector.load %arg11[%c0_3, %c0_4] : memref<8x32xf32, #tpu.memory_space<vmem>>, vector<8x32xf32>
      %12 = arith.truncf %11 : vector<8x32xf32> to vector<8x32xbf16>
      %c0_5 = arith.constant 0 : index
      %c0_6 = arith.constant 0 : index
      %13 = vector.load %arg8[%c0_5, %c0_6] : memref<32x128xbf16, #tpu.memory_space<vmem>>, vector<32x128xbf16>
      %cst = arith.constant dense<0.000000e+00> : vector<8x128xf32>
      %14 = tpu.matmul %12, %13, %cst {dimension_numbers = #tpu.dot_dimension_numbers<[1], [0], [0], [1], [0, 0, 1, 1], [], []>} : vector<8x32xbf16>, vector<32x128xbf16>, vector<8x128xf32> -> vector<8x128xf32>
      %c0_7 = arith.constant 0 : index
      %c0_8 = arith.constant 0 : index
      %15 = vector.load %arg9[%c0_7, %c0_8] : memref<1x128xf32, #tpu.memory_space<vmem>>, vector<1x128xf32>
      %16 = vector.broadcast %15 : vector<1x128xf32> to vector<8x128xf32>
      %17 = arith.addf %14, %16 : vector<8x128xf32>
      %c0_9 = arith.constant 0 : index
      %c0_10 = arith.constant 0 : index
      %18 = vector.load %arg10[%c0_9, %c0_10] : memref<8x128xf32, #tpu.memory_space<vmem>>, vector<8x128xf32>
      tpu.vector_store %arg10[%c0_9, %c0_10], %17 {strides = array<i32>} : memref<8x128xf32, #tpu.memory_space<vmem>>, vector<8x128xf32>,
    } else {
    }
    return
  }
  func.func @transform_0(%arg0: i32, %arg1: i32, %arg2: memref<1xi32, #tpu.memory_space<smem>>) -> (i32, i32) {
    %c0_i32 = arith.constant 0 : i32
    %c0_i32_0 = arith.constant 0 : i32
    return %arg0, %c0_i32 : i32, i32
  }
  func.func @transform_1(%arg0: i32, %arg1: i32, %arg2: memref<1xi32, #tpu.memory_space<smem>>) -> (i32, i32, i32) {
    %c0_i32 = arith.constant 0 : i32
    %c0_i32_0 = arith.constant 0 : i32
    return %arg0, %arg1, %c0_i32 : i32, i32, i32
  }
  func.func @transform_2(%arg0: i32, %arg1: i32, %arg2: memref<1xi32, #tpu.memory_space<smem>>) -> (i32, i32) {
    %c0_i32 = arith.constant 0 : i32
    %c0_i32_0 = arith.constant 0 : i32
    %c0_i32_1 = arith.constant 0 : i32
    return %c0_i32, %c0_i32_0 : i32, i32
  }
  func.func @transform_3(%arg0: i32, %arg1: i32, %arg2: memref<1xi32, #tpu.memory_space<smem>>) -> (i32, i32) {
    %c0_i32 = arith.constant 0 : i32
    %c0_i32_0 = arith.constant 0 : i32
    %c0_i32_1 = arith.constant 0 : i32
    return %c0_i32, %c0_i32_0 : i32, i32
  }
  func.func @transform_4(%arg0: i32, %arg1: i32, %arg2: memref<1xi32, #tpu.memory_space<smem>>) -> (i32, i32) {
    %c0_i32 = arith.constant 0 : i32
    %c0_i32_0 = arith.constant 0 : i32
    %c0_i32_1 = arith.constant 0 : i32
    return %c0_i32, %c0_i32_0 : i32, i32
  }
  func.func @transform_5(%arg0: i32, %arg1: i32, %arg2: memref<1xi32, #tpu.memory_space<smem>>) -> (i32, i32) {
    %c0_i32 = arith.constant 0 : i32
    %c0_i32_0 = arith.constant 0 : i32
    %c0_i32_1 = arith.constant 0 : i32
    return %c0_i32, %c0_i32_0 : i32, i32
  }
  func.func @transform_6(%arg0: i32, %arg1: i32, %arg2: memref<1xi32, #tpu.memory_space<smem>>) -> (i32, i32) {
    %c0_i32 = arith.constant 0 : i32
    %c0_i32_0 = arith.constant 0 : i32
    %c0_i32_1 = arith.constant 0 : i32
    return %c0_i32, %c0_i32_0 : i32, i32
  }
  func.func @transform_7(%arg0: i32, %arg1: i32, %arg2: memref<1xi32, #tpu.memory_space<smem>>) -> (i32, i32) {
    %c0_i32 = arith.constant 0 : i32
    %c0_i32_0 = arith.constant 0 : i32
    return %arg0, %c0_i32 : i32, i32
  }
}

</mosaic_0001>

<llo_original>
// kernel: auvi_subnet_forward.1
$region0: #{auvi_subnet_forward.1}
  #allocation0 [shape = 'u32[]', space=smem, size = 0x4, offset = 0x4, fixed_abs, tag = 'smem constant byte address 0x4 - core index']
  #allocation1 [shape = 'u32[72,128]{1,0:T(1,128)}', space=vmem, size = 0x9000, scoped, tag = 'internal scratch']
  #allocation2 [shape = 'f32[8,32]{1,0:T(8,128)}', space=vmem, size = 0x1000, scoped, tag = 'scratch operand']
  #allocation3 [shape = 'f32[8,32]{1,0:T(8,128)}', space=vmem, size = 0x1000, scoped, tag = 'scratch operand']
  #allocation4 [shape = 's32[1]{0}', space=sflag, size = 0x4, scoped, tag = 'scoped memory for auvi_subnet_forward.1']
  #allocation5 [shape = 's32[1]{0:T(128)S(6)}', space=smem, size = 0x200, scoped, tag = 'prefetched SMEM operand 0']
  %s0 = inlined_call_operand.<no memory space> [shape: s32[1], index: 0, kind: input, shape index: {}]
  %s1 = inlined_call_operand.vmem [shape: s32[16,1], index: 1, kind: input, shape index: {}]
  %s2 = inlined_call_operand.vmem [shape: bf16[16,24,128], index: 2, kind: input, shape index: {}]
  %s3 = inlined_call_operand.vmem [shape: bf16[128,128], index: 3, kind: input, shape index: {}]
  %s4 = inlined_call_operand.vmem [shape: bf16[32,128], index: 4, kind: input, shape index: {}]
  %s5 = inlined_call_operand.vmem [shape: f32[1,128], index: 5, kind: input, shape index: {}]
  %s6 = inlined_call_operand.vmem [shape: bf16[32,128], index: 6, kind: input, shape index: {}]
  %s7 = inlined_call_operand.vmem [shape: f32[1,128], index: 7, kind: input, shape index: {}]
  %s8 = inlined_call_operand.hbm [shape: f32[16,128], index: 8, kind: output, shape index: {}]
  %s9 = sld [smem:[#allocation0]]
  $region114: #{auvi_subnet_forward.1} parent=0
    _
  %s11 = ssub.s32 1, %s9
  %s12 = scalar_select 0, %s11, %s9
  %13 = sst [smem:[#allocation5]] %s0
  $region1: #{auvi_subnet_forward.1} parent=0
    #allocation6 [shape = 'u8[32768]{0}', space=vmem, size = 0x8000, scoped, tag = 'input window, operand 2']
    #allocation7 [shape = 'u8[8192]{0}', space=vmem, size = 0x2000, scoped, tag = 'output window, operand 0']
    #allocation8 [shape = 's32[2]{0}', space=sflag, size = 0x8, scoped, tag = 'scoped memory for auvi_subnet_forward.1']
    %14 = vsyncpa [#allocation8], 0
    %s15 = scalar_lea.sflag [#allocation8], 1
    %16 = vsyncpa %s15, 0
    loop: start=0, step=1, limit=8
    $region2: #{auvi_subnet_forward.1} parent=1 // loop_pre_header
      _
    $region3: #{auvi_subnet_forward.1} parent=1 // loop_header
      %s18 = sphi 0, %s22
      %p19 = scmp.ge.s32.totalorder %s18, 8
      %s25 = sphi 0, %s37
      %s26 = sphi 0, %s33
      %s27 = sphi 0, %s25
      %s28 = sphi 0, %s26
      %s29 = sphi 0, %s27
      %s30 = sphi 0, %s28
      %s40 = sphi 0, %s42
      %s43 = sphi 0, %s40
      %s44 = sphi 0, %s43
      %s60 = sphi 0, %s44
      %s68 = sphi 0, %s70
      %s71 = sphi 0, %s68
      %s72 = sphi 0, %s71
      %s88 = sphi 0, %s72
      %s92 = sphi 0, %s92
      %s94 = sphi 0, %s92
      %s95 = sphi 0, %s94
      %s109 = sphi 0, %s95
      %s113 = sphi 0, %s113
      %s115 = sphi 0, %s113
      %s116 = sphi 0, %s115
      %s130 = sphi 0, %s116
      %s134 = sphi 0, %s134
      %s136 = sphi 0, %s134
      %s137 = sphi 0, %s136
      %s151 = sphi 0, %s137
      %s155 = sphi 0, %s155
      %s157 = sphi 0, %s155
      %s158 = sphi 0, %s157
      %s172 = sphi 0, %s158
      %s176 = sphi 0, %s176
      %s178 = sphi 0, %s176
      %s179 = sphi 0, %s178
      %s193 = sphi 0, %s179
      %s199 = sphi 0, %s201
      %s202 = sphi 0, %s199
      %s203 = sphi 0, %s202
      %s219 = sphi 0, %s203
    $region4: #{auvi_subnet_forward.1} parent=1 // loop_header_branch
      %21 = sbr.rel (%p19) target = $region8
    $region5: #{auvi_subnet_forward.1} parent=1 // loop_body
      %s23 = ssub.s32 %s18, 1
      %s24 = ssub.s32 %s18, 2
      %s31 = sadd.s32 1, %s26
      %p32 = scmp.ge.s32.totalorder %s31, 3
      %s33 = scalar_select %p32, 0, %s31
      %s34 = sadd.s32 1, %s25
      %s35 = scalar_select %p32, %s34, %s25
      %p36 = scmp.ge.s32.totalorder %s35, 2
      %s37 = scalar_select %p36, 0, %s35
      %s38 = ssub.s32 %s25, %s37
      %p39 = scmp.eq.s32.totalorder %s38, 0
      %s41 = sadd.s32 %s40, 1
      %s42 = scalar_select %p39, %s40, %s41
      %p45 = pneg %p39
      %p46 = scmp.eq.s32.totalorder %s18, 5
      %p47 = por %p45, %p46
      %p48 = scmp.ne.s32.totalorder %s40, %s43
      %p49 = scmp.eq.s32.totalorder %s18, 0
      %p50 = por %p48, %p49
      %p51 = scmp.ne.s32.totalorder %s40, %s43
      %p52 = scmp.eq.s32.totalorder %s23, 5
      %p53 = por %p51, %p52
      %p54 = scmp.ne.s32.totalorder %s43, %s44
      %p55 = scmp.eq.s32.totalorder %s23, 0
      %p56 = por %p54, %p55
      %p57 = scmp.ne.s32.totalorder %s43, %s44
      %p58 = scmp.eq.s32.totalorder %s24, 5
      %p59 = por %p57, %p58
      %p61 = scmp.ne.s32.totalorder %s44, %s60
      %p62 = scmp.eq.s32.totalorder %s24, 0
      %p63 = por %p61, %p62
      %s64 = ssub.s32 %s25, %s37
      %s65 = ssub.s32 %s26, %s33
      %s66 = sor.u32 %s64, %s65
      %p67 = scmp.eq.s32.totalorder %s66, 0
      %s69 = sadd.s32 %s68, 1
      %s70 = scalar_select %p67, %s68, %s69
      %p73 = pneg %p67
      %p74 = scmp.eq.s32.totalorder %s18, 5
      %p75 = por %p73, %p74
      %p76 = scmp.ne.s32.totalorder %s68, %s71
      %p77 = scmp.eq.s32.totalorder %s18, 0
      %p78 = por %p76, %p77
      %p79 = scmp.ne.s32.totalorder %s68, %s71
      %p80 = scmp.eq.s32.totalorder %s23, 5
      %p81 = por %p79, %p80
      %p82 = scmp.ne.s32.totalorder %s71, %s72
      %p83 = scmp.eq.s32.totalorder %s23, 0
      %p84 = por %p82, %p83
      %p85 = scmp.ne.s32.totalorder %s71, %s72
      %p86 = scmp.eq.s32.totalorder %s24, 5
      %p87 = por %p85, %p86
      %p89 = scmp.ne.s32.totalorder %s72, %s88
      %p90 = scmp.eq.s32.totalorder %s24, 0
      %p91 = por %p89, %p90
      %s93 = sadd.s32 %s92, 1
      %p96 = scmp.eq.s32.totalorder %s18, 5
      %p97 = scmp.ne.s32.totalorder %s92, %s94
      %p98 = scmp.eq.s32.totalorder %s18, 0
      %p99 = por %p97, %p98
      %p100 = scmp.ne.s32.totalorder %s92, %s94
      %p101 = scmp.eq.s32.totalorder %s23, 5
      %p102 = por %p100, %p101
      %p103 = scmp.ne.s32.totalorder %s94, %s95
      %p104 = scmp.eq.s32.totalorder %s23, 0
      %p105 = por %p103, %p104
      %p106 = scmp.ne.s32.totalorder %s94, %s95
      %p107 = scmp.eq.s32.totalorder %s24, 5
      %p108 = por %p106, %p107
      %p110 = scmp.ne.s32.totalorder %s95, %s109
      %p111 = scmp.eq.s32.totalorder %s24, 0
      %p112 = por %p110, %p111
      %s114 = sadd.s32 %s113, 1
      %p117 = scmp.eq.s32.totalorder %s18, 5
      %p118 = scmp.ne.s32.totalorder %s113, %s115
      %p119 = scmp.eq.s32.totalorder %s18, 0
      %p120 = por %p118, %p119
      %p121 = scmp.ne.s32.totalorder %s113, %s115
      %p122 = scmp.eq.s32.totalorder %s23, 5
      %p123 = por %p121, %p122
      %p124 = scmp.ne.s32.totalorder %s115, %s116
      %p125 = scmp.eq.s32.totalorder %s23, 0
      %p126 = por %p124, %p125
      %p127 = scmp.ne.s32.totalorder %s115, %s116
      %p128 = scmp.eq.s32.totalorder %s24, 5
      %p129 = por %p127, %p128
      %p131 = scmp.ne.s32.totalorder %s116, %s130
      %p132 = scmp.eq.s32.totalorder %s24, 0
      %p133 = por %p131, %p132
      %s135 = sadd.s32 %s134, 1
      %p138 = scmp.eq.s32.totalorder %s18, 5
      %p139 = scmp.ne.s32.totalorder %s134, %s136
      %p140 = scmp.eq.s32.totalorder %s18, 0
      %p141 = por %p139, %p140
      %p142 = scmp.ne.s32.totalorder %s134, %s136
      %p143 = scmp.eq.s32.totalorder %s23, 5
      %p144 = por %p142, %p143
      %p145 = scmp.ne.s32.totalorder %s136, %s137
      %p146 = scmp.eq.s32.totalorder %s23, 0
      %p147 = por %p145, %p146
      %p148 = scmp.ne.s32.totalorder %s136, %s137
      %p149 = scmp.eq.s32.totalorder %s24, 5
      %p150 = por %p148, %p149
      %p152 = scmp.ne.s32.totalorder %s137, %s151
      %p153 = scmp.eq.s32.totalorder %s24, 0
      %p154 = por %p152, %p153
      %s156 = sadd.s32 %s155, 1
      %p159 = scmp.eq.s32.totalorder %s18, 5
      %p160 = scmp.ne.s32.totalorder %s155, %s157
      %p161 = scmp.eq.s32.totalorder %s18, 0
      %p162 = por %p160, %p161
      %p163 = scmp.ne.s32.totalorder %s155, %s157
      %p164 = scmp.eq.s32.totalorder %s23, 5
      %p165 = por %p163, %p164
      %p166 = scmp.ne.s32.totalorder %s157, %s158
      %p167 = scmp.eq.s32.totalorder %s23, 0
      %p168 = por %p166, %p167
      %p169 = scmp.ne.s32.totalorder %s157, %s158
      %p170 = scmp.eq.s32.totalorder %s24, 5
      %p171 = por %p169, %p170
      %p173 = scmp.ne.s32.totalorder %s158, %s172
      %p174 = scmp.eq.s32.totalorder %s24, 0
      %p175 = por %p173, %p174
      %s177 = sadd.s32 %s176, 1
      %p180 = scmp.eq.s32.totalorder %s18, 5
      %p181 = scmp.ne.s32.totalorder %s176, %s178
      %p182 = scmp.eq.s32.totalorder %s18, 0
      %p183 = por %p181, %p182
      %p184 = scmp.ne.s32.totalorder %s176, %s178
      %p185 = scmp.eq.s32.totalorder %s23, 5
      %p186 = por %p184, %p185
      %p187 = scmp.ne.s32.totalorder %s178, %s179
      %p188 = scmp.eq.s32.totalorder %s23, 0
      %p189 = por %p187, %p188
      %p190 = scmp.ne.s32.totalorder %s178, %s179
      %p191 = scmp.eq.s32.totalorder %s24, 5
      %p192 = por %p190, %p191
      %p194 = scmp.ne.s32.totalorder %s179, %s193
      %p195 = scmp.eq.s32.totalorder %s24, 0
      %p196 = por %p194, %p195
      %s197 = ssub.s32 %s25, %s37
      %p198 = scmp.eq.s32.totalorder %s197, 0
      %s200 = sadd.s32 %s199, 1
      %s201 = scalar_select %p198, %s199, %s200
      %p204 = pneg %p198
      %p205 = scmp.eq.s32.totalorder %s18, 5
      %p206 = por %p204, %p205
      %p207 = scmp.ne.s32.totalorder %s199, %s202
      %p208 = scmp.eq.s32.totalorder %s18, 0
      %p209 = por %p207, %p208
      %p210 = scmp.ne.s32.totalorder %s199, %s202
      %p211 = scmp.eq.s32.totalorder %s23, 5
      %p212 = por %p210, %p211
      %p213 = scmp.ne.s32.totalorder %s202, %s203
      %p214 = scmp.eq.s32.totalorder %s23, 0
      %p215 = por %p213, %p214
      %p216 = scmp.ne.s32.totalorder %s202, %s203
      %p217 = scmp.eq.s32.totalorder %s24, 5
      %p218 = por %p216, %p217
      %p220 = scmp.ne.s32.totalorder %s203, %s219
      %p221 = scmp.eq.s32.totalorder %s24, 0
      %p222 = por %p220, %p221
      %p223 = scmp.le.s32.totalorder 1, %s18
      %p224 = scmp.lt.s32.totalorder %s18, 7
      %p225 = pnand %p223, %p224
      %p226 = pneg %p225
      // Predicated region
      $region9: #{auvi_subnet_forward.1} parent=5 // pred_check
        _
      $region10: #{auvi_subnet_forward.1} parent=5 // pred_check_branch
        %228 = sbr.rel (%p225) target = $region12
      $region11: #{auvi_subnet_forward.1} parent=5 // pred_region
        %s229 = ssub.s32 %s18, 1
        // Predicated region
        $region13: #{auvi_subnet_forward.1} parent=11 // pred_check
          %p230 = pneg %p105
        $region14: #{auvi_subnet_forward.1} parent=11 // pred_check_branch
          %232 = sbr.rel (%p230) target = $region16
        $region15: #{auvi_subnet_forward.1} parent=11 // pred_region
          _
        $region16: #{auvi_subnet_forward.1} parent=11 // pred_fallthru
          _
        // Predicated region
        $region17: #{auvi_subnet_forward.1} parent=11 // pred_check
          %p233 = pneg %p126
        $region18: #{auvi_subnet_forward.1} parent=11 // pred_check_branch
          %235 = sbr.rel (%p233) target = $region20
        $region19: #{auvi_subnet_forward.1} parent=11 // pred_region
          _
        $region20: #{auvi_subnet_forward.1} parent=11 // pred_fallthru
          _
        // Predicated region
        $region21: #{auvi_subnet_forward.1} parent=11 // pred_check
          %p236 = pneg %p147
        $region22: #{auvi_subnet_forward.1} parent=11 // pred_check_branch
          %238 = sbr.rel (%p236) target = $region24
        $region23: #{auvi_subnet_forward.1} parent=11 // pred_region
          _
        $region24: #{auvi_subnet_forward.1} parent=11 // pred_fallthru
          _
        // Predicated region
        $region25: #{auvi_subnet_forward.1} parent=11 // pred_check
          %p239 = pneg %p168
        $region26: #{auvi_subnet_forward.1} parent=11 // pred_check_branch
          %241 = sbr.rel (%p239) target = $region28
        $region27: #{auvi_subnet_forward.1} parent=11 // pred_region
          _
        $region28: #{auvi_subnet_forward.1} parent=11 // pred_fallthru
          _
        // Predicated region
        $region29: #{auvi_subnet_forward.1} parent=11 // pred_check
          %p242 = pneg %p189
        $region30: #{auvi_subnet_forward.1} parent=11 // pred_check_branch
          %244 = sbr.rel (%p242) target = $region32
        $region31: #{auvi_subnet_forward.1} parent=11 // pred_region
          _
        $region32: #{auvi_subnet_forward.1} parent=11 // pred_fallthru
          _
      $region12: #{auvi_subnet_forward.1} parent=5 // pred_fallthru
        _
      %p245 = scmp.lt.s32.totalorder %s18, 6
      // Predicated region
      $region33: #{auvi_subnet_forward.1} parent=5 // pred_check
        %p246 = pneg %p245
      $region34: #{auvi_subnet_forward.1} parent=5 // pred_check_branch
        %248 = sbr.rel (%p246) target = $region36
      $region35: #{auvi_subnet_forward.1} parent=5 // pred_region
        // Predicated region
        $region37: #{auvi_subnet_forward.1} parent=35 // pred_check
          %p249 = pneg %p50
        $region38: #{auvi_subnet_forward.1} parent=35 // pred_check_branch
          %251 = sbr.rel (%p249) target = $region40
        $region39: #{auvi_subnet_forward.1} parent=35 // pred_region
          %p252 = scmp.lt.s32.totalorder %s25, 1
          %s253 = scalar_select %p252, %s25, 1
          %s254 = smul.addr %s253, 8
          %s255 = scalar_lea.vmem %s1, %s254
        $region40: #{auvi_subnet_forward.1} parent=35 // pred_fallthru
          _
        // Predicated region
        $region41: #{auvi_subnet_forward.1} parent=35 // pred_check
          %p256 = pneg %p78
        $region42: #{auvi_subnet_forward.1} parent=35 // pred_check_branch
          %258 = sbr.rel (%p256) target = $region44
        $region43: #{auvi_subnet_forward.1} parent=35 // pred_region
          %s259 = sand.u32 %s68, 1
          %s260 = sand.u32 %s68, 1
          %s261 = smul.addr %s260, 32
          %s262 = scalar_lea.vmem [#allocation6], %s261
          %s263 = smul.u32 8, %s25
          %s264 = smul.addr %s263, 3
          %s265 = sadd.s32 %s26, %s264
          %s266 = smul.addr %s265, 4
          %s267 = scalar_lea.vmem %s2, %s266
          // Predicated region
          $region45: #{auvi_subnet_forward.1} parent=43 // pred_check
            _
          $region46: #{auvi_subnet_forward.1} parent=43 // pred_check_branch
            %269 = sbr.rel (0) target = $region48
          $region47: #{auvi_subnet_forward.1} parent=43 // pred_region
            // Predicated region
            $region49: #{auvi_subnet_forward.1} parent=47 // pred_check
              _
            $region50: #{auvi_subnet_forward.1} parent=47 // pred_check_branch
              %271 = sbr.rel target = $region52
            $region51: #{auvi_subnet_forward.1} parent=47 // pred_region
              // Predicated region
              $region64: #{auvi_subnet_forward.1} parent=51 // pred_check
                _
              $region65: #{auvi_subnet_forward.1} parent=51 // pred_check_branch
                %301 = sbr.rel (0) target = $region67
              $region66: #{auvi_subnet_forward.1} parent=51 // pred_region
                loop: start=0, step=1, limit=1
                $region68: #{auvi_subnet_forward.1} parent=66 // loop_pre_header
                  _
                $region69: #{auvi_subnet_forward.1} parent=66 // loop_header
                  %s303 = sphi 0, %s307
                  %p304 = scmp.ge.s32.totalorder %s303, 1
                  %s308 = sphi %s267, %s267
                  %s309 = sphi %s262, %s262
                $region70: #{auvi_subnet_forward.1} parent=66 // loop_header_branch
                  %306 = sbr.rel (%p304) target = $region74
                $region71: #{auvi_subnet_forward.1} parent=66 // loop_body
                  _
                $region72: #{auvi_subnet_forward.1} parent=66 // loop_footer
                  %s307 = sadd.s32 1, %s303
                $region73: #{auvi_subnet_forward.1} parent=66 // loop_footer_branch
                  %302 = sbr.rel target = $region69
                $region74: #{auvi_subnet_forward.1} parent=66 // loop_exit
                  _
                %s311 = ssub.s32 16, 1
                loop: start=0, step=1, limit=1
                $region75: #{auvi_subnet_forward.1} parent=66 // loop_pre_header
                  _
                $region76: #{auvi_subnet_forward.1} parent=66 // loop_header
                  %s313 = sphi 0, %s317
                  %p314 = scmp.ge.s32.totalorder %s313, 1
                  %s318 = sphi %s267, %s267
                  %s319 = sphi %s262, %s262
                $region77: #{auvi_subnet_forward.1} parent=66 // loop_header_branch
                  %316 = sbr.rel (%p314) target = $region81
                $region78: #{auvi_subnet_forward.1} parent=66 // loop_body
                  %v320 = vld [vmem:[%s318] sm:%s311]
                  %321 = vst [vmem:[%s319] sm:%s311] %v320
                  %v322 = vld [vmem:[%s318 + $0xc] sm:%s311]
                  %323 = vst [vmem:[%s319 + $0x4] sm:%s311] %v322
                  %v324 = vld [vmem:[%s318 + $0x18] sm:%s311]
                  %325 = vst [vmem:[%s319 + $0x8] sm:%s311] %v324
                  %v326 = vld [vmem:[%s318 + $0x24] sm:%s311]
                  %327 = vst [vmem:[%s319 + $0xc] sm:%s311] %v326
                  %v328 = vld [vmem:[%s318 + $0x30] sm:%s311]
                  %329 = vst [vmem:[%s319 + $0x10] sm:%s311] %v328
                  %v330 = vld [vmem:[%s318 + $0x3c] sm:%s311]
                  %331 = vst [vmem:[%s319 + $0x14] sm:%s311] %v330
                  %v332 = vld [vmem:[%s318 + $0x48] sm:%s311]
                  %333 = vst [vmem:[%s319 + $0x18] sm:%s311] %v332
                  %v334 = vld [vmem:[%s318 + $0x54] sm:%s311]
                  %335 = vst [vmem:[%s319 + $0x1c] sm:%s311] %v334
                $region79: #{auvi_subnet_forward.1} parent=66 // loop_footer
                  %s317 = sadd.s32 1, %s313
                $region80: #{auvi_subnet_forward.1} parent=66 // loop_footer_branch
                  %312 = sbr.rel target = $region76
                $region81: #{auvi_subnet_forward.1} parent=66 // loop_exit
                  _
              $region67: #{auvi_subnet_forward.1} parent=51 // pred_fallthru
                _
            $region52: #{auvi_subnet_forward.1} parent=47 // pred_fallthru
              _
            // Predicated region
            $region53: #{auvi_subnet_forward.1} parent=47 // pred_check
              _
            $region54: #{auvi_subnet_forward.1} parent=47 // pred_check_branch
              %273 = sbr.rel (0) target = $region56
            $region55: #{auvi_subnet_forward.1} parent=47 // pred_region
              %s275 = ssub.s32 16, 1
              loop: start=0, step=1, limit=1
              $region57: #{auvi_subnet_forward.1} parent=55 // loop_pre_header
                _
              $region58: #{auvi_subnet_forward.1} parent=55 // loop_header
                %s277 = sphi 0, %s281
                %p278 = scmp.ge.s32.totalorder %s277, 1
                %s282 = sphi %s267, %s267
                %s283 = sphi %s262, %s262
              $region59: #{auvi_subnet_forward.1} parent=55 // loop_header_branch
                %280 = sbr.rel (%p278) target = $region63
              $region60: #{auvi_subnet_forward.1} parent=55 // loop_body
                %v284 = vld [vmem:[%s282] sm:%s275]
                %285 = vst [vmem:[%s283] sm:%s275] %v284
                %v286 = vld [vmem:[%s282 + $0xc] sm:%s275]
                %287 = vst [vmem:[%s283 + $0x4] sm:%s275] %v286
                %v288 = vld [vmem:[%s282 + $0x18] sm:%s275]
                %289 = vst [vmem:[%s283 + $0x8] sm:%s275] %v288
                %v290 = vld [vmem:[%s282 + $0x24] sm:%s275]
                %291 = vst [vmem:[%s283 + $0xc] sm:%s275] %v290
                %v292 = vld [vmem:[%s282 + $0x30] sm:%s275]
                %293 = vst [vmem:[%s283 + $0x10] sm:%s275] %v292
                %v294 = vld [vmem:[%s282 + $0x3c] sm:%s275]
                %295 = vst [vmem:[%s283 + $0x14] sm:%s275] %v294
                %v296 = vld [vmem:[%s282 + $0x48] sm:%s275]
                %297 = vst [vmem:[%s283 + $0x18] sm:%s275] %v296
                %v298 = vld [vmem:[%s282 + $0x54] sm:%s275]
                %299 = vst [vmem:[%s283 + $0x1c] sm:%s275] %v298
              $region61: #{auvi_subnet_forward.1} parent=55 // loop_footer
                %s281 = sadd.s32 1, %s277
              $region62: #{auvi_subnet_forward.1} parent=55 // loop_footer_branch
                %276 = sbr.rel target = $region58
              $region63: #{auvi_subnet_forward.1} parent=55 // loop_exit
                _
            $region56: #{auvi_subnet_forward.1} parent=47 // pred_fallthru
              _
          $region48: #{auvi_subnet_forward.1} parent=43 // pred_fallthru
            _
          %336 = vnop
        $region44: #{auvi_subnet_forward.1} parent=35 // pred_fallthru
          _
      $region36: #{auvi_subnet_forward.1} parent=5 // pred_fallthru
        _
      %p337 = scmp.le.s32.totalorder 1, %s18
      %p338 = scmp.lt.s32.totalorder %s18, 7
      %p339 = pnand %p337, %p338
      %p340 = pneg %p339
      // Predicated region
      $region82: #{auvi_subnet_forward.1} parent=5 // pred_check
        _
      $region83: #{auvi_subnet_forward.1} parent=5 // pred_check_branch
        %342 = sbr.rel (%p339) target = $region85
      $region84: #{auvi_subnet_forward.1} parent=5 // pred_region
        %s343 = ssub.s32 %s18, 1
        %s344 = sand.u32 %s71, 1
        %s345 = sand.u32 %s71, 1
        %s346 = smul.addr %s345, 32
        %s347 = scalar_lea.vmem [#allocation6], %s346
        // Predicated region
        $region86: #{auvi_subnet_forward.1} parent=84 // pred_check
          %p348 = pneg %p84
        $region87: #{auvi_subnet_forward.1} parent=84 // pred_check_branch
          %350 = sbr.rel (%p348) target = $region89
        $region88: #{auvi_subnet_forward.1} parent=84 // pred_region
          _
        $region89: #{auvi_subnet_forward.1} parent=84 // pred_fallthru
          _
        %p351 = scmp.lt.s32.totalorder %s27, 1
        %s352 = scalar_select %p351, %s27, 1
        %s353 = smul.addr %s352, 8
        %s354 = scalar_lea.vmem %s1, %s353
        %p355 = pneg %p56
        %p356 = pneg %p53
        %s357 = sand.u32 %s71, 1
        %s358 = sand.u32 %s71, 1
        %s359 = smul.addr %s358, 32
        %s360 = scalar_lea.vmem [#allocation6], %s359
        %p361 = pneg %p84
        %p362 = pneg %p81
        %p363 = pneg %p105
        %p364 = pneg %p102
        %p365 = pneg %p126
        %p366 = pneg %p123
        %p367 = pneg %p147
        %p368 = pneg %p144
        %p369 = pneg %p168
        %p370 = pneg %p165
        %p371 = pneg %p189
        %p372 = pneg %p186
        %p373 = pneg %p215
        %p374 = pneg %p212
        %s375 = sand.u32 %s202, 1
        %s376 = scalar_lea.sflag [#allocation8], %s375
        %s377 = sand.u32 %s202, 1
        %s378 = smul.addr %s377, 8
        %s379 = scalar_lea.vmem [#allocation7], %s378
        %p380 = scmp.lt.s32.totalorder %s27, 1
        %s381 = scalar_select %p380, %s27, 1
        %s382 = smul.addr %s381, 8
        %s383 = scalar_lea.vmem %s1, %s382
        %s384 = smul.u32 8, %s27
        %s386 = smul.u32 %s28, 8
        %p387 = scmp.eq.s32.totalorder %s28, 0
        // Predicated region
        $region90: #{auvi_subnet_forward.1} parent=84 // pred_check
          %p388 = pneg %p387
        $region91: #{auvi_subnet_forward.1} parent=84 // pred_check_branch
          %390 = sbr.rel (%p388) target = $region93
        $region92: #{auvi_subnet_forward.1} parent=84 // pred_region
          %vm391 = vcmask 261120
          %392 = vst.msk [vmem:[#allocation2] sm:$0xff] %vm391, 0.0
          %393 = vst.msk [vmem:[#allocation3] sm:$0xff] %vm391, 0.0
        $region93: #{auvi_subnet_forward.1} parent=84 // pred_fallthru
          _
        %s394 = sld [smem:[#allocation5]]
        %p395 = scmp.lt.s32.totalorder %s386, %s394
        // Predicated region
        $region94: #{auvi_subnet_forward.1} parent=84 // pred_check
          %p396 = pneg %p395
        $region95: #{auvi_subnet_forward.1} parent=84 // pred_check_branch
          %398 = sbr.rel (%p396) target = $region97
        $region96: #{auvi_subnet_forward.1} parent=84 // pred_region
          %v399 = vld [vmem:[%s347] sm:$0xf]
          %v400 = vld [vmem:[%s347 + $0x4] sm:$0xf]
          %v401 = vld [vmem:[%s347 + $0x8] sm:$0xf]
          %v402 = vld [vmem:[%s347 + $0xc] sm:$0xf]
          %v403 = vld [vmem:[%s347 + $0x10] sm:$0xf]
          %v404 = vld [vmem:[%s347 + $0x14] sm:$0xf]
          %v405 = vld [vmem:[%s347 + $0x18] sm:$0xf]
          %v406 = vld [vmem:[%s347 + $0x1c] sm:$0xf]
          %v407 = vld [vmem:[%s3] sm:$0xf]
          %v408 = vld [vmem:[%s3 + $0x4] sm:$0xf]
          %v409 = vld [vmem:[%s3 + $0x8] sm:$0xf]
          %v410 = vld [vmem:[%s3 + $0xc] sm:$0xf]
          %v411 = vld [vmem:[%s3 + $0x10] sm:$0xf]
          %v412 = vld [vmem:[%s3 + $0x14] sm:$0xf]
          %v413 = vld [vmem:[%s3 + $0x18] sm:$0xf]
          %v414 = vld [vmem:[%s3 + $0x1c] sm:$0xf]
          %v415 = vld [vmem:[%s3 + $0x20] sm:$0xf]
          %v416 = vld [vmem:[%s3 + $0x24] sm:$0xf]
          %v417 = vld [vmem:[%s3 + $0x28] sm:$0xf]
          %v418 = vld [vmem:[%s3 + $0x2c] sm:$0xf]
          %v419 = vld [vmem:[%s3 + $0x30] sm:$0xf]
          %v420 = vld [vmem:[%s3 + $0x34] sm:$0xf]
          %v421 = vld [vmem:[%s3 + $0x38] sm:$0xf]
          %v422 = vld [vmem:[%s3 + $0x3c] sm:$0xf]
          %v423 = vld [vmem:[%s5] sm:$0x1]
          %v425 = vperm.slane %v423, 0
          %v435 = vunpack.c.l.b16 %v399
          %v436 = vunpack.c.l.b16 %v400
          %v437 = vunpack.c.l.b16 %v401
          %v438 = vunpack.c.l.b16 %v402
          %v439 = vunpack.c.l.b16 %v403
          %v440 = vunpack.c.l.b16 %v404
          %v441 = vunpack.c.l.b16 %v405
          %v442 = vunpack.c.l.b16 %v406
          %v443 = vpack.c.b16 %v436, %v435
          %v444 = vpack.c.b16 %v438, %v437
          %v445 = vpack.c.b16 %v440, %v439
          %v446 = vpack.c.b16 %v442, %v441
          %v467 = vunpack.c.l.b16 %v407
          %v468 = vunpack.c.l.b16 %v408
          %v469 = vunpack.c.l.b16 %v409
          %v470 = vunpack.c.l.b16 %v410
          %v471 = vunpack.c.l.b16 %v411
          %v472 = vunpack.c.l.b16 %v412
          %v473 = vunpack.c.l.b16 %v413
          %v474 = vunpack.c.l.b16 %v414
          %v475 = vunpack.c.l.b16 %v415
          %v476 = vunpack.c.l.b16 %v416
          %v477 = vunpack.c.l.b16 %v417
          %v478 = vunpack.c.l.b16 %v418
          %v479 = vunpack.c.l.b16 %v419
          %v480 = vunpack.c.l.b16 %v420
          %v481 = vunpack.c.l.b16 %v421
          %v482 = vunpack.c.l.b16 %v422
          %v483 = vpack.c.b16 %v468, %v467
          %v484 = vpack.c.b16 %v470, %v469
          %v485 = vpack.c.b16 %v472, %v471
          %v486 = vpack.c.b16 %v474, %v473
          %v487 = vpack.c.b16 %v476, %v475
          %v488 = vpack.c.b16 %v478, %v477
          %v489 = vpack.c.b16 %v480, %v479
          %v490 = vpack.c.b16 %v482, %v481
          %499 = vmatpush.bf16.msra.mxu0 %v490
          %500 = vmatpush.bf16.msra.mxu0 %v489
          %501 = vmatpush.bf16.msra.mxu0 %v488
          %502 = vmatpush.bf16.msra.mxu0 %v487
          %503 = vmatpush.bf16.msra.mxu0 %v486
          %504 = vmatpush.bf16.msra.mxu0 %v485
          %505 = vmatpush.bf16.msra.mxu0 %v484
          %506 = vmatpush.bf16.msra.mxu0 %v483
          %507 = vmatmul.bf16.gmra.mxu0 %v443
          %v508 = vpop.f32.mrf.mxu0
          %v509 = vadd.f32 %v425, %v508
          %v510 = vpop.f32.mrf.mxu0
          %v511 = vadd.f32 %v425, %v510
          %512 = vmatmul.bf16.gmra.mxu0 %v444
          %v513 = vpop.f32.mrf.mxu0
          %v514 = vadd.f32 %v425, %v513
          %v515 = vpop.f32.mrf.mxu0
          %v516 = vadd.f32 %v425, %v515
          %517 = vmatmul.bf16.gmra.mxu0 %v445
          %v518 = vpop.f32.mrf.mxu0
          %v519 = vadd.f32 %v425, %v518
          %v520 = vpop.f32.mrf.mxu0
          %v521 = vadd.f32 %v425, %v520
          %522 = vmatmul.bf16.gmra.mxu0 %v446
          %v523 = vpop.f32.mrf.mxu0
          %v524 = vadd.f32 %v425, %v523
          %v525 = vpop.f32.mrf.mxu0
          %v526 = vadd.f32 %v425, %v525
          %527 = vdwg.mxu0
          %v528 = vld [vmem:[%s4] sm:$0xf]
          %v529 = vld [vmem:[%s4 + $0x4] sm:$0xf]
          %v530 = vld [vmem:[%s4 + $0x8] sm:$0xf]
          %v531 = vld [vmem:[%s4 + $0xc] sm:$0xf]
          %v532 = vld [vmem:[%s383] sm:$0xff]
          %533 = vset.pattern.permute.xlu0 0
          %534 = vperm.xlu0 %533, %v532
          %v535 = vpop.permute.xlu0 %534
          %v536 = vld [vmem:[#allocation2] sm:$0xff]
          %v537 = vld [vmem:[#allocation3] sm:$0xff]
          %v538 = vpack.c.bf16 %v536, %v536
          %v543 = vunpack.c.l.b16 %v528
          %v544 = vunpack.c.l.b16 %v529
          %v545 = vunpack.c.l.b16 %v530
          %v546 = vunpack.c.l.b16 %v531
          %v547 = vpack.c.b16 %v544, %v543
          %v548 = vpack.c.b16 %v546, %v545
          %v559 = vrot.slane %v511, 7
          %vm560 = vcmask 1041409
          %v561 = vsel %vm560, %v559, %v509
          %v562 = vrot.slane %v514, 6
          %vm563 = vcmask 1042434
          %v564 = vsel %vm563, %v562, %v561
          %v565 = vrot.slane %v516, 5
          %vm566 = vcmask 1043459
          %v567 = vsel %vm566, %v565, %v564
          %v568 = vrot.slane %v519, 4
          %vm569 = vcmask 1044484
          %v570 = vsel %vm569, %v568, %v567
          %v571 = vrot.slane %v521, 3
          %vm572 = vcmask 1045509
          %v573 = vsel %vm572, %v571, %v570
          %v574 = vrot.slane %v524, 2
          %vm575 = vcmask 1046534
          %v576 = vsel %vm575, %v574, %v573
          %v577 = vrot.slane %v526, 1
          %vm578 = vcmask 1047559
          %v579 = vsel %vm578, %v577, %v576
          %vm581 = vcmask 261120
          %v583 = vsel %vm581, %v538, 0
          %585 = vmatpush.bf16.msra.mxu0 0
          %586 = vmatpush.bf16.msra.mxu0 0
          %587 = vmatpush.bf16.msra.mxu0 0
          %588 = vmatpush.bf16.msra.mxu0 0
          %589 = vmatpush.bf16.msra.mxu0 0
          %590 = vmatpush.bf16.msra.mxu0 0
          %591 = vmatpush.bf16.msra.mxu0 %v548
          %592 = vmatpush.bf16.msra.mxu0 %v547
          %593 = vmatmul.bf16.gmra.mxu0 %v583
          %v594 = vpop.f32.mrf.mxu0
          %v595 = vadd.f32 %v579, %v594
          %v596 = vpop.f32.mrf.mxu0
          %597 = vdwg.mxu0
          %v598 = vxor.u32 %v595, 2147483648
          %v599 = vmul.f32 %v598, 1.442695
          %v600 = vpow.pop %v599
          %v601 = vadd.f32 %v600, 1.0
          %v602 = vrcp.pop %v601
          %v603 = vmul.f32 %v601, %v602
          %v604 = vsub.f32 1.0, %v603
          %v605 = vmul.f32 %v602, %v604
          %v606 = vadd.f32 %v602, %v605
          %vm607 = vweird.f32 %v601
          %vm608 = vweird.f32 %v602
          %vm609 = vmor %vm607, %vm608
          %v610 = vsel %vm609, %v602, %v606
          %v611 = vand.u32 2147483647, %v601
          %vm612 = vcmp.eq.f32.partialorder %v611, 8.507059e+37
          %v613 = vand.u32 %v601, 2147483648
          %v614 = vor.u32 1.1754944e-38, %v613
          %v615 = vsel %vm612, %v614, %v610
          %v616 = vmul.f32 1.0, %v615
          %v617 = vtanh.pop %v595
          %619 = vrot.lane.b32.xlu0 %v537, 32
          %v620 = vpop.permute.xlu0 %619
          %v622 = vmul.f32 %v616, %v620
          %624 = vrot.lane.b32.xlu0 %v617, 64
          %v625 = vpop.permute.xlu0 %624
          %v627 = vmul.f32 %v616, %v625
          %629 = vrot.lane.b32.xlu0 %v627, 32
          %v630 = vpop.permute.xlu0 %629
          %v632 = vadd.f32 %v622, %v630
          %v633 = vtanh.pop %v632
          %635 = vrot.lane.b32.xlu0 %v633, 64
          %v636 = vpop.permute.xlu0 %635
          %v638 = vmul.f32 %v616, %v636
          %v639 = vstv %s386
          %vm640 = vcmp.lt.s32.totalorder %v639, %v535
          %642 = vrot.lane.b32.xlu0 %v536, 96
          %v643 = vpop.permute.xlu0 %642
          %v645 = vsel %vm640, %v638, %v643
          %v646 = vsel %vm640, %v632, %v620
          %s647 = sadd.s32 %s386, 1
          %v648 = vpack.c.bf16 %v645, %v645
          %650 = vrot.lane.b32.xlu0 %v648, 32
          %v651 = vpop.permute.xlu0 %650
          %v652 = vrot.slane %v509, 1
          %v653 = vsel %vm560, %v511, %v652
          %v654 = vrot.slane %v514, 7
          %v655 = vsel %vm563, %v654, %v653
          %v656 = vrot.slane %v516, 6
          %v657 = vsel %vm566, %v656, %v655
          %v658 = vrot.slane %v519, 5
          %v659 = vsel %vm569, %v658, %v657
          %v660 = vrot.slane %v521, 4
          %v661 = vsel %vm572, %v660, %v659
          %v662 = vrot.slane %v524, 3
          %v663 = vsel %vm575, %v662, %v661
          %v664 = vrot.slane %v526, 2
          %v665 = vsel %vm578, %v664, %v663
          %v668 = vsel %vm581, %v651, 0
          %670 = vmatpush.bf16.msra.mxu0 0
          %671 = vmatpush.bf16.msra.mxu0 0
          %672 = vmatpush.bf16.msra.mxu0 0
          %673 = vmatpush.bf16.msra.mxu0 0
          %674 = vmatpush.bf16.msra.mxu0 0
          %675 = vmatpush.bf16.msra.mxu0 0
          %676 = vmatpush.bf16.msra.mxu0 %v548
          %677 = vmatpush.bf16.msra.mxu0 %v547
          %678 = vmatmul.bf16.gmra.mxu0 %v668
          %v679 = vpop.f32.mrf.mxu0
          %v680 = vadd.f32 %v665, %v679
          %v681 = vpop.f32.mrf.mxu0
          %682 = vdwg.mxu0
          %v683 = vxor.u32 %v680, 2147483648
          %v684 = vmul.f32 %v683, 1.442695
          %v685 = vpow.pop %v684
          %v686 = vadd.f32 %v685, 1.0
          %v687 = vrcp.pop %v686
          %v688 = vmul.f32 %v686, %v687
          %v689 = vsub.f32 1.0, %v688
          %v690 = vmul.f32 %v687, %v689
          %v691 = vadd.f32 %v687, %v690
          %vm692 = vweird.f32 %v686
          %vm693 = vweird.f32 %v687
          %vm694 = vmor %vm692, %vm693
          %v695 = vsel %vm694, %v687, %v691
          %v696 = vand.u32 2147483647, %v686
          %vm697 = vcmp.eq.f32.partialorder %v696, 8.507059e+37
          %v698 = vand.u32 %v686, 2147483648
          %v699 = vor.u32 1.1754944e-38, %v698
          %v700 = vsel %vm697, %v699, %v695
          %v701 = vmul.f32 1.0, %v700
          %v702 = vtanh.pop %v680
          %v703 = vmul.f32 %v701, %v646
          %705 = vrot.lane.b32.xlu0 %v702, 64
          %v706 = vpop.permute.xlu0 %705
          %v708 = vmul.f32 %v701, %v706
          %710 = vrot.lane.b32.xlu0 %v708, 32
          %v711 = vpop.permute.xlu0 %710
          %v713 = vadd.f32 %v703, %v711
          %v714 = vtanh.pop %v713
          %716 = vrot.lane.b32.xlu0 %v714, 64
          %v717 = vpop.permute.xlu0 %716
          %v719 = vmul.f32 %v701, %v717
          %v720 = vstv %s647
          %vm721 = vcmp.lt.s32.totalorder %v720, %v535
          %v722 = vsel %vm721, %v719, %v645
          %v723 = vsel %vm721, %v713, %v646
          %s724 = sadd.s32 %s386, 2
          %v725 = vpack.c.bf16 %v722, %v722
          %727 = vrot.lane.b32.xlu0 %v725, 32
          %v728 = vpop.permute.xlu0 %727
          %v729 = vrot.slane %v509, 2
          %v730 = vrot.slane %v511, 1
          %v731 = vsel %vm560, %v730, %v729
          %v732 = vsel %vm563, %v514, %v731
          %v733 = vrot.slane %v516, 7
          %v734 = vsel %vm566, %v733, %v732
          %v735 = vrot.slane %v519, 6
          %v736 = vsel %vm569, %v735, %v734
          %v737 = vrot.slane %v521, 5
          %v738 = vsel %vm572, %v737, %v736
          %v739 = vrot.slane %v524, 4
          %v740 = vsel %vm575, %v739, %v738
          %v741 = vrot.slane %v526, 3
          %v742 = vsel %vm578, %v741, %v740
          %v745 = vsel %vm581, %v728, 0
          %747 = vmatpush.bf16.msra.mxu0 0
          %748 = vmatpush.bf16.msra.mxu0 0
          %749 = vmatpush.bf16.msra.mxu0 0
          %750 = vmatpush.bf16.msra.mxu0 0
          %751 = vmatpush.bf16.msra.mxu0 0
          %752 = vmatpush.bf16.msra.mxu0 0
          %753 = vmatpush.bf16.msra.mxu0 %v548
          %754 = vmatpush.bf16.msra.mxu0 %v547
          %755 = vmatmul.bf16.gmra.mxu0 %v745
          %v756 = vpop.f32.mrf.mxu0
          %v757 = vadd.f32 %v742, %v756
          %v758 = vpop.f32.mrf.mxu0
          %759 = vdwg.mxu0
          %v760 = vxor.u32 %v757, 2147483648
          %v761 = vmul.f32 %v760, 1.442695
          %v762 = vpow.pop %v761
          %v763 = vadd.f32 %v762, 1.0
          %v764 = vrcp.pop %v763
          %v765 = vmul.f32 %v763, %v764
          %v766 = vsub.f32 1.0, %v765
          %v767 = vmul.f32 %v764, %v766
          %v768 = vadd.f32 %v764, %v767
          %vm769 = vweird.f32 %v763
          %vm770 = vweird.f32 %v764
          %vm771 = vmor %vm769, %vm770
          %v772 = vsel %vm771, %v764, %v768
          %v773 = vand.u32 2147483647, %v763
          %vm774 = vcmp.eq.f32.partialorder %v773, 8.507059e+37
          %v775 = vand.u32 %v763, 2147483648
          %v776 = vor.u32 1.1754944e-38, %v775
          %v777 = vsel %vm774, %v776, %v772
          %v778 = vmul.f32 1.0, %v777
          %v779 = vtanh.pop %v757
          %v780 = vmul.f32 %v778, %v723
          %782 = vrot.lane.b32.xlu0 %v779, 64
          %v783 = vpop.permute.xlu0 %782
          %v785 = vmul.f32 %v778, %v783
          %787 = vrot.lane.b32.xlu0 %v785, 32
          %v788 = vpop.permute.xlu0 %787
          %v790 = vadd.f32 %v780, %v788
          %v791 = vtanh.pop %v790
          %793 = vrot.lane.b32.xlu0 %v791, 64
          %v794 = vpop.permute.xlu0 %793
          %v796 = vmul.f32 %v778, %v794
          %v797 = vstv %s724
          %vm798 = vcmp.lt.s32.totalorder %v797, %v535
          %v799 = vsel %vm798, %v796, %v722
          %v800 = vsel %vm798, %v790, %v723
          %s801 = sadd.s32 %s386, 3
          %v802 = vpack.c.bf16 %v799, %v799
          %804 = vrot.lane.b32.xlu0 %v802, 32
          %v805 = vpop.permute.xlu0 %804
          %v806 = vrot.slane %v509, 3
          %v807 = vrot.slane %v511, 2
          %v808 = vsel %vm560, %v807, %v806
          %v809 = vrot.slane %v514, 1
          %v810 = vsel %vm563, %v809, %v808
          %v811 = vsel %vm566, %v516, %v810
          %v812 = vrot.slane %v519, 7
          %v813 = vsel %vm569, %v812, %v811
          %v814 = vrot.slane %v521, 6
          %v815 = vsel %vm572, %v814, %v813
          %v816 = vrot.slane %v524, 5
          %v817 = vsel %vm575, %v816, %v815
          %v818 = vrot.slane %v526, 4
          %v819 = vsel %vm578, %v818, %v817
          %v822 = vsel %vm581, %v805, 0
          %824 = vmatpush.bf16.msra.mxu0 0
          %825 = vmatpush.bf16.msra.mxu0 0
          %826 = vmatpush.bf16.msra.mxu0 0
          %827 = vmatpush.bf16.msra.mxu0 0
          %828 = vmatpush.bf16.msra.mxu0 0
          %829 = vmatpush.bf16.msra.mxu0 0
          %830 = vmatpush.bf16.msra.mxu0 %v548
          %831 = vmatpush.bf16.msra.mxu0 %v547
          %832 = vmatmul.bf16.gmra.mxu0 %v822
          %v833 = vpop.f32.mrf.mxu0
          %v834 = vadd.f32 %v819, %v833
          %v835 = vpop.f32.mrf.mxu0
          %836 = vdwg.mxu0
          %v837 = vxor.u32 %v834, 2147483648
          %v838 = vmul.f32 %v837, 1.442695
          %v839 = vpow.pop %v838
          %v840 = vadd.f32 %v839, 1.0
          %v841 = vrcp.pop %v840
          %v842 = vmul.f32 %v840, %v841
          %v843 = vsub.f32 1.0, %v842
          %v844 = vmul.f32 %v841, %v843
          %v845 = vadd.f32 %v841, %v844
          %vm846 = vweird.f32 %v840
          %vm847 = vweird.f32 %v841
          %vm848 = vmor %vm846, %vm847
          %v849 = vsel %vm848, %v841, %v845
          %v850 = vand.u32 2147483647, %v840
          %vm851 = vcmp.eq.f32.partialorder %v850, 8.507059e+37
          %v852 = vand.u32 %v840, 2147483648
          %v853 = vor.u32 1.1754944e-38, %v852
          %v854 = vsel %vm851, %v853, %v849
          %v855 = vmul.f32 1.0, %v854
          %v856 = vtanh.pop %v834
          %v857 = vmul.f32 %v855, %v800
          %859 = vrot.lane.b32.xlu0 %v856, 64
          %v860 = vpop.permute.xlu0 %859
          %v862 = vmul.f32 %v855, %v860
          %864 = vrot.lane.b32.xlu0 %v862, 32
          %v865 = vpop.permute.xlu0 %864
          %v867 = vadd.f32 %v857, %v865
          %v868 = vtanh.pop %v867
          %870 = vrot.lane.b32.xlu0 %v868, 64
          %v871 = vpop.permute.xlu0 %870
          %v873 = vmul.f32 %v855, %v871
          %v874 = vstv %s801
          %vm875 = vcmp.lt.s32.totalorder %v874, %v535
          %v876 = vsel %vm875, %v873, %v799
          %v877 = vsel %vm875, %v867, %v800
          %s878 = sadd.s32 %s386, 4
          %v879 = vpack.c.bf16 %v876, %v876
          %881 = vrot.lane.b32.xlu0 %v879, 32
          %v882 = vpop.permute.xlu0 %881
          %v883 = vrot.slane %v509, 4
          %v884 = vrot.slane %v511, 3
          %v885 = vsel %vm560, %v884, %v883
          %v886 = vrot.slane %v514, 2
          %v887 = vsel %vm563, %v886, %v885
          %v888 = vrot.slane %v516, 1
          %v889 = vsel %vm566, %v888, %v887
          %v890 = vsel %vm569, %v519, %v889
          %v891 = vrot.slane %v521, 7
          %v892 = vsel %vm572, %v891, %v890
          %v893 = vrot.slane %v524, 6
          %v894 = vsel %vm575, %v893, %v892
          %v895 = vrot.slane %v526, 5
          %v896 = vsel %vm578, %v895, %v894
          %v899 = vsel %vm581, %v882, 0
          %901 = vmatpush.bf16.msra.mxu0 0
          %902 = vmatpush.bf16.msra.mxu0 0
          %903 = vmatpush.bf16.msra.mxu0 0
          %904 = vmatpush.bf16.msra.mxu0 0
          %905 = vmatpush.bf16.msra.mxu0 0
          %906 = vmatpush.bf16.msra.mxu0 0
          %907 = vmatpush.bf16.msra.mxu0 %v548
          %908 = vmatpush.bf16.msra.mxu0 %v547
          %909 = vmatmul.bf16.gmra.mxu0 %v899
          %v910 = vpop.f32.mrf.mxu0
          %v911 = vadd.f32 %v896, %v910
          %v912 = vpop.f32.mrf.mxu0
          %913 = vdwg.mxu0
          %v914 = vxor.u32 %v911, 2147483648
          %v915 = vmul.f32 %v914, 1.442695
          %v916 = vpow.pop %v915
          %v917 = vadd.f32 %v916, 1.0
          %v918 = vrcp.pop %v917
          %v919 = vmul.f32 %v917, %v918
          %v920 = vsub.f32 1.0, %v919
          %v921 = vmul.f32 %v918, %v920
          %v922 = vadd.f32 %v918, %v921
          %vm923 = vweird.f32 %v917
          %vm924 = vweird.f32 %v918
          %vm925 = vmor %vm923, %vm924
          %v926 = vsel %vm925, %v918, %v922
          %v927 = vand.u32 2147483647, %v917
          %vm928 = vcmp.eq.f32.partialorder %v927, 8.507059e+37
          %v929 = vand.u32 %v917, 2147483648
          %v930 = vor.u32 1.1754944e-38, %v929
          %v931 = vsel %vm928, %v930, %v926
          %v932 = vmul.f32 1.0, %v931
          %v933 = vtanh.pop %v911
          %v934 = vmul.f32 %v932, %v877
          %936 = vrot.lane.b32.xlu0 %v933, 64
          %v937 = vpop.permute.xlu0 %936
          %v939 = vmul.f32 %v932, %v937
          %941 = vrot.lane.b32.xlu0 %v939, 32
          %v942 = vpop.permute.xlu0 %941
          %v944 = vadd.f32 %v934, %v942
          %v945 = vtanh.pop %v944
          %947 = vrot.lane.b32.xlu0 %v945, 64
          %v948 = vpop.permute.xlu0 %947
          %v950 = vmul.f32 %v932, %v948
          %v951 = vstv %s878
          %vm952 = vcmp.lt.s32.totalorder %v951, %v535
          %v953 = vsel %vm952, %v950, %v876
          %v954 = vsel %vm952, %v944, %v877
          %s955 = sadd.s32 %s386, 5
          %v956 = vpack.c.bf16 %v953, %v953
          %958 = vrot.lane.b32.xlu0 %v956, 32
          %v959 = vpop.permute.xlu0 %958
          %v960 = vrot.slane %v509, 5
          %v961 = vrot.slane %v511, 4
          %v962 = vsel %vm560, %v961, %v960
          %v963 = vrot.slane %v514, 3
          %v964 = vsel %vm563, %v963, %v962
          %v965 = vrot.slane %v516, 2
          %v966 = vsel %vm566, %v965, %v964
          %v967 = vrot.slane %v519, 1
          %v968 = vsel %vm569, %v967, %v966
          %v969 = vsel %vm572, %v521, %v968
          %v970 = vrot.slane %v524, 7
          %v971 = vsel %vm575, %v970, %v969
          %v972 = vrot.slane %v526, 6
          %v973 = vsel %vm578, %v972, %v971
          %v976 = vsel %vm581, %v959, 0
          %978 = vmatpush.bf16.msra.mxu0 0
          %979 = vmatpush.bf16.msra.mxu0 0
          %980 = vmatpush.bf16.msra.mxu0 0
          %981 = vmatpush.bf16.msra.mxu0 0
          %982 = vmatpush.bf16.msra.mxu0 0
          %983 = vmatpush.bf16.msra.mxu0 0
          %984 = vmatpush.bf16.msra.mxu0 %v548
          %985 = vmatpush.bf16.msra.mxu0 %v547
          %986 = vmatmul.bf16.gmra.mxu0 %v976
          %v987 = vpop.f32.mrf.mxu0
          %v988 = vadd.f32 %v973, %v987
          %v989 = vpop.f32.mrf.mxu0
          %990 = vdwg.mxu0
          %v991 = vxor.u32 %v988, 2147483648
          %v992 = vmul.f32 %v991, 1.442695
          %v993 = vpow.pop %v992
          %v994 = vadd.f32 %v993, 1.0
          %v995 = vrcp.pop %v994
          %v996 = vmul.f32 %v994, %v995
          %v997 = vsub.f32 1.0, %v996
          %v998 = vmul.f32 %v995, %v997
          %v999 = vadd.f32 %v995, %v998
          %vm1000 = vweird.f32 %v994
          %vm1001 = vweird.f32 %v995
          %vm1002 = vmor %vm1000, %vm1001
          %v1003 = vsel %vm1002, %v995, %v999
          %v1004 = vand.u32 2147483647, %v994
          %vm1005 = vcmp.eq.f32.partialorder %v1004, 8.507059e+37
          %v1006 = vand.u32 %v994, 2147483648
          %v1007 = vor.u32 1.1754944e-38, %v1006
          %v1008 = vsel %vm1005, %v1007, %v1003
          %v1009 = vmul.f32 1.0, %v1008
          %v1010 = vtanh.pop %v988
          %v1011 = vmul.f32 %v1009, %v954
          %1013 = vrot.lane.b32.xlu0 %v1010, 64
          %v1014 = vpop.permute.xlu0 %1013
          %v1016 = vmul.f32 %v1009, %v1014
          %1018 = vrot.lane.b32.xlu0 %v1016, 32
          %v1019 = vpop.permute.xlu0 %1018
          %v1021 = vadd.f32 %v1011, %v1019
          %v1022 = vtanh.pop %v1021
          %1024 = vrot.lane.b32.xlu0 %v1022, 64
          %v1025 = vpop.permute.xlu0 %1024
          %v1027 = vmul.f32 %v1009, %v1025
          %v1028 = vstv %s955
          %vm1029 = vcmp.lt.s32.totalorder %v1028, %v535
          %v1030 = vsel %vm1029, %v1027, %v953
          %v1031 = vsel %vm1029, %v1021, %v954
          %s1032 = sadd.s32 %s386, 6
          %v1033 = vpack.c.bf16 %v1030, %v1030
          %1035 = vrot.lane.b32.xlu0 %v1033, 32
          %v1036 = vpop.permute.xlu0 %1035
          %v1037 = vrot.slane %v509, 6
          %v1038 = vrot.slane %v511, 5
          %v1039 = vsel %vm560, %v1038, %v1037
          %v1040 = vrot.slane %v514, 4
          %v1041 = vsel %vm563, %v1040, %v1039
          %v1042 = vrot.slane %v516, 3
          %v1043 = vsel %vm566, %v1042, %v1041
          %v1044 = vrot.slane %v519, 2
          %v1045 = vsel %vm569, %v1044, %v1043
          %v1046 = vrot.slane %v521, 1
          %v1047 = vsel %vm572, %v1046, %v1045
          %v1048 = vsel %vm575, %v524, %v1047
          %v1049 = vrot.slane %v526, 7
          %v1050 = vsel %vm578, %v1049, %v1048
          %v1053 = vsel %vm581, %v1036, 0
          %1055 = vmatpush.bf16.msra.mxu0 0
          %1056 = vmatpush.bf16.msra.mxu0 0
          %1057 = vmatpush.bf16.msra.mxu0 0
          %1058 = vmatpush.bf16.msra.mxu0 0
          %1059 = vmatpush.bf16.msra.mxu0 0
          %1060 = vmatpush.bf16.msra.mxu0 0
          %1061 = vmatpush.bf16.msra.mxu0 %v548
          %1062 = vmatpush.bf16.msra.mxu0 %v547
          %1063 = vmatmul.bf16.gmra.mxu0 %v1053
          %v1064 = vpop.f32.mrf.mxu0
          %v1065 = vadd.f32 %v1050, %v1064
          %v1066 = vpop.f32.mrf.mxu0
          %1067 = vdwg.mxu0
          %v1068 = vxor.u32 %v1065, 2147483648
          %v1069 = vmul.f32 %v1068, 1.442695
          %v1070 = vpow.pop %v1069
          %v1071 = vadd.f32 %v1070, 1.0
          %v1072 = vrcp.pop %v1071
          %v1073 = vmul.f32 %v1071, %v1072
          %v1074 = vsub.f32 1.0, %v1073
          %v1075 = vmul.f32 %v1072, %v1074
          %v1076 = vadd.f32 %v1072, %v1075
          %vm1077 = vweird.f32 %v1071
          %vm1078 = vweird.f32 %v1072
          %vm1079 = vmor %vm1077, %vm1078
          %v1080 = vsel %vm1079, %v1072, %v1076
          %v1081 = vand.u32 2147483647, %v1071
          %vm1082 = vcmp.eq.f32.partialorder %v1081, 8.507059e+37
          %v1083 = vand.u32 %v1071, 2147483648
          %v1084 = vor.u32 1.1754944e-38, %v1083
          %v1085 = vsel %vm1082, %v1084, %v1080
          %v1086 = vmul.f32 1.0, %v1085
          %v1087 = vtanh.pop %v1065
          %v1088 = vmul.f32 %v1086, %v1031
          %1090 = vrot.lane.b32.xlu0 %v1087, 64
          %v1091 = vpop.permute.xlu0 %1090
          %v1093 = vmul.f32 %v1086, %v1091
          %1095 = vrot.lane.b32.xlu0 %v1093, 32
          %v1096 = vpop.permute.xlu0 %1095
          %v1098 = vadd.f32 %v1088, %v1096
          %v1099 = vtanh.pop %v1098
          %1101 = vrot.lane.b32.xlu0 %v1099, 64
          %v1102 = vpop.permute.xlu0 %1101
          %v1104 = vmul.f32 %v1086, %v1102
          %v1105 = vstv %s1032
          %vm1106 = vcmp.lt.s32.totalorder %v1105, %v535
          %v1107 = vsel %vm1106, %v1104, %v1030
          %v1108 = vsel %vm1106, %v1098, %v1031
          %s1109 = sadd.s32 %s386, 7
          %v1110 = vpack.c.bf16 %v1107, %v1107
          %1112 = vrot.lane.b32.xlu0 %v1110, 32
          %v1113 = vpop.permute.xlu0 %1112
          %v1114 = vrot.slane %v509, 7
          %v1115 = vrot.slane %v511, 6
          %v1116 = vsel %vm560, %v1115, %v1114
          %v1117 = vrot.slane %v514, 5
          %v1118 = vsel %vm563, %v1117, %v1116
          %v1119 = vrot.slane %v516, 4
          %v1120 = vsel %vm566, %v1119, %v1118
          %v1121 = vrot.slane %v519, 3
          %v1122 = vsel %vm569, %v1121, %v1120
          %v1123 = vrot.slane %v521, 2
          %v1124 = vsel %vm572, %v1123, %v1122
          %v1125 = vrot.slane %v524, 1
          %v1126 = vsel %vm575, %v1125, %v1124
          %v1127 = vsel %vm578, %v526, %v1126
          %v1130 = vsel %vm581, %v1113, 0
          %1132 = vmatpush.bf16.msra.mxu0 0
          %1133 = vmatpush.bf16.msra.mxu0 0
          %1134 = vmatpush.bf16.msra.mxu0 0
          %1135 = vmatpush.bf16.msra.mxu0 0
          %1136 = vmatpush.bf16.msra.mxu0 0
          %1137 = vmatpush.bf16.msra.mxu0 0
          %1138 = vmatpush.bf16.msra.mxu0 %v548
          %1139 = vmatpush.bf16.msra.mxu0 %v547
          %1140 = vmatmul.bf16.gmra.mxu0 %v1130
          %v1141 = vpop.f32.mrf.mxu0
          %v1142 = vadd.f32 %v1127, %v1141
          %v1143 = vpop.f32.mrf.mxu0
          %1144 = vdwg.mxu0
          %v1145 = vxor.u32 %v1142, 2147483648
          %v1146 = vmul.f32 %v1145, 1.442695
          %v1147 = vpow.pop %v1146
          %v1148 = vadd.f32 %v1147, 1.0
          %v1149 = vrcp.pop %v1148
          %v1150 = vmul.f32 %v1148, %v1149
          %v1151 = vsub.f32 1.0, %v1150
          %v1152 = vmul.f32 %v1149, %v1151
          %v1153 = vadd.f32 %v1149, %v1152
          %vm1154 = vweird.f32 %v1148
          %vm1155 = vweird.f32 %v1149
          %vm1156 = vmor %vm1154, %vm1155
          %v1157 = vsel %vm1156, %v1149, %v1153
          %v1158 = vand.u32 2147483647, %v1148
          %vm1159 = vcmp.eq.f32.partialorder %v1158, 8.507059e+37
          %v1160 = vand.u32 %v1148, 2147483648
          %v1161 = vor.u32 1.1754944e-38, %v1160
          %v1162 = vsel %vm1159, %v1161, %v1157
          %v1163 = vmul.f32 1.0, %v1162
          %v1164 = vtanh.pop %v1142
          %v1165 = vmul.f32 %v1163, %v1108
          %1167 = vrot.lane.b32.xlu0 %v1164, 64
          %v1168 = vpop.permute.xlu0 %1167
          %v1170 = vmul.f32 %v1163, %v1168
          %1172 = vrot.lane.b32.xlu0 %v1170, 32
          %v1173 = vpop.permute.xlu0 %1172
          %v1175 = vadd.f32 %v1165, %v1173
          %v1176 = vtanh.pop %v1175
          %1178 = vrot.lane.b32.xlu0 %v1176, 64
          %v1179 = vpop.permute.xlu0 %1178
          %v1181 = vmul.f32 %v1163, %v1179
          %v1182 = vstv %s1109
          %vm1183 = vcmp.lt.s32.totalorder %v1182, %v535
          %v1184 = vsel %vm1183, %v1181, %v1107
          %v1185 = vsel %vm1183, %v1175, %v1108
          %1187 = vrot.lane.b32.xlu0 %v1184, 32
          %v1188 = vpop.permute.xlu0 %1187
          %1190 = vst.msk [vmem:[#allocation2] sm:$0xff] %vm581, %v1188
          %1192 = vrot.lane.b32.xlu0 %v1185, 96
          %v1193 = vpop.permute.xlu0 %1192
          %1195 = vst.msk [vmem:[#allocation3] sm:$0xff] %vm581, %v1193
        $region97: #{auvi_subnet_forward.1} parent=84 // pred_fallthru
          _
        %p1196 = scmp.eq.s32.totalorder %s28, 2
        // Predicated region
        $region98: #{auvi_subnet_forward.1} parent=84 // pred_check
          %p1197 = pneg %p1196
        $region99: #{auvi_subnet_forward.1} parent=84 // pred_check_branch
          %1199 = sbr.rel (%p1197) target = $region101
        $region100: #{auvi_subnet_forward.1} parent=84 // pred_region
          %v1200 = vld [vmem:[#allocation2] sm:$0xff]
          %v1201 = vpack.c.bf16 %v1200, %v1200
          %v1202 = vld [vmem:[%s6] sm:$0xf]
          %v1203 = vld [vmem:[%s6 + $0x4] sm:$0xf]
          %v1204 = vld [vmem:[%s6 + $0x8] sm:$0xf]
          %v1205 = vld [vmem:[%s6 + $0xc] sm:$0xf]
          %v1206 = vld [vmem:[%s7] sm:$0x1]
          %v1208 = vperm.slane %v1206, 0
          %v1214 = vunpack.c.l.b16 %v1202
          %v1215 = vunpack.c.l.b16 %v1203
          %v1216 = vunpack.c.l.b16 %v1204
          %v1217 = vunpack.c.l.b16 %v1205
          %v1218 = vpack.c.b16 %v1215, %v1214
          %v1219 = vpack.c.b16 %v1217, %v1216
          %vm1222 = vcmask 261120
          %v1224 = vsel %vm1222, %v1201, 0
          %1226 = vmatpush.bf16.msra.mxu0 0
          %1227 = vmatpush.bf16.msra.mxu0 0
          %1228 = vmatpush.bf16.msra.mxu0 0
          %1229 = vmatpush.bf16.msra.mxu0 0
          %1230 = vmatpush.bf16.msra.mxu0 0
          %1231 = vmatpush.bf16.msra.mxu0 0
          %1232 = vmatpush.bf16.msra.mxu0 %v1219
          %1233 = vmatpush.bf16.msra.mxu0 %v1218
          %1234 = vmatmul.bf16.gmra.mxu0 %v1224
          %v1235 = vpop.f32.mrf.mxu0
          %v1236 = vadd.f32 %v1208, %v1235
          %v1237 = vpop.f32.mrf.mxu0
          %1238 = vdwg.mxu0
          %1239 = vst [vmem:[%s379] sm:$0xff] %v1236
        $region101: #{auvi_subnet_forward.1} parent=84 // pred_fallthru
          _
        %s1240 = sand.u32 %s202, 1
        %s1241 = scalar_lea.sflag [#allocation8], %s1240
        %s1242 = sand.u32 %s202, 1
        %s1243 = smul.addr %s1242, 8
        %s1244 = scalar_lea.vmem [#allocation7], %s1243
        // Predicated region
        $region102: #{auvi_subnet_forward.1} parent=84 // pred_check
          %p1245 = pneg %p212
        $region103: #{auvi_subnet_forward.1} parent=84 // pred_check_branch
          %1247 = sbr.rel (%p1245) target = $region105
        $region104: #{auvi_subnet_forward.1} parent=84 // pred_region
          %1249 = vsyncadd %s1241, 0
          %s1250 = smul.addr %s27, 8
          %s1251 = scalar_lea.hbm %s8, %s1250
          %s1253 = sshll.u32 %s1244, 4
          %s1254 = int_to_ptr.vmem [resolvable:$true] %s1253
          %s1255 = sshll.u32 %s1251, 4
          %s1256 = int_to_ptr.hbm [resolvable:$true] %s1255
          %1258 = dma.vmem_to_hbm [thread:$0]  %s1254, 128, %s1256, %s1241
        $region105: #{auvi_subnet_forward.1} parent=84 // pred_fallthru
          _
      $region85: #{auvi_subnet_forward.1} parent=5 // pred_fallthru
        _
      %p1259 = scmp.le.s32.totalorder 2, %s18
      // Predicated region
      $region106: #{auvi_subnet_forward.1} parent=5 // pred_check
        %p1260 = pneg %p1259
      $region107: #{auvi_subnet_forward.1} parent=5 // pred_check_branch
        %1262 = sbr.rel (%p1260) target = $region109
      $region108: #{auvi_subnet_forward.1} parent=5 // pred_region
        %s1263 = ssub.s32 %s18, 2
        // Predicated region
        $region110: #{auvi_subnet_forward.1} parent=108 // pred_check
          %p1264 = pneg %p218
        $region111: #{auvi_subnet_forward.1} parent=108 // pred_check_branch
          %1266 = sbr.rel (%p1264) target = $region113
        $region112: #{auvi_subnet_forward.1} parent=108 // pred_region
          %s1267 = sand.u32 %s203, 1
          %s1268 = scalar_lea.sflag [#allocation8], %s1267
          %s1269 = sand.u32 %s203, 1
          %s1270 = smul.addr %s1269, 8
          %s1271 = scalar_lea.vmem [#allocation7], %s1270
          %1273 = dma.done %s1268, 128
        $region113: #{auvi_subnet_forward.1} parent=108 // pred_fallthru
          _
      $region109: #{auvi_subnet_forward.1} parent=5 // pred_fallthru
        _
    $region6: #{auvi_subnet_forward.1} parent=1 // loop_footer
      %s22 = sadd.s32 1, %s18
    $region7: #{auvi_subnet_forward.1} parent=1 // loop_footer_branch
      %17 = sbr.rel target = $region3
    $region8: #{auvi_subnet_forward.1} parent=1 // loop_exit
      _
    %1274 = vsyncpa [#allocation8], 1
    %s1275 = scalar_lea.sflag [#allocation8], 1
    %1276 = vsyncpa %s1275, 1

</llo_original>
